<compile_context>
chip_gen: v7x
topology: tpu7x:2x2x1
jax: 0.10.0
libtpu: 0.0.40
codegen_flags: <defaults>
</compile_context>

<pallas_src>
import jax
import jax.numpy as jnp
from jax.experimental import pallas as pl
from jax.experimental.pallas import tpu as pltpu


def _propagator_kernel(a_ref, s_in_ref, s_out_ref, s_cur_ref,
                       w_in_ref, w_out_ref, w_cur_ref, b_ref,
                       out_ref, a_in_acc, a_out_acc):
    """Grid = (batch tiles ["parallel"], NE reduction blocks ["arbitrary"]).

    a_ref     : [TB, n_node, TK]  A_in column block (same slice feeds both messages)
    s_in_ref  : [TB, TK, D]       state_in row block
    s_out_ref : [TB, TK, D]       state_out row block
    s_cur_ref : [TB, n_node, D]   resident across the K axis
    w_*_ref   : [3, D, D]         gate weights stacked on a leading (r, z, t) axis
    b_ref     : [3, 1, D]         gate biases (f32)
    out_ref   : [TB, n_node, D]   resident across the K axis, written at k == last
    a_*_acc   : [TB, n_node, D]   f32 VMEM accumulators for the message bmm
    """
    k = pl.program_id(1)

    @pl.when(k == 0)
    def _():
        a_in_acc[...] = jnp.zeros_like(a_in_acc)
        a_out_acc[...] = jnp.zeros_like(a_out_acc)

    # Partial message aggregation for this NE block (A block loaded once, used
    # for both messages): A_in[:, :, kblk] @ state[kblk].
    a_blk = a_ref[...]
    a_in_acc[...] += jnp.einsum('bij,bjd->bid', a_blk, s_in_ref[...],
                                preferred_element_type=jnp.float32)
    a_out_acc[...] += jnp.einsum('bij,bjd->bid', a_blk, s_out_ref[...],
                                 preferred_element_type=jnp.float32)

    @pl.when(k == pl.num_programs(1) - 1)
    def _():
        tb, n_node, d = out_ref.shape
        m = tb * n_node
        mm_dtype = w_in_ref.dtype

        # Flatten the batch tile into the MXU M dimension (free: either TB == 1
        # or n_node is a sublane multiple, enforced by the tile chooser).
        a_in = a_in_acc[...].reshape(m, d).astype(mm_dtype)
        a_out = a_out_acc[...].reshape(m, d).astype(mm_dtype)
        s_cur_mm = s_cur_ref[...].reshape(m, d)           # matmul operand (compute dtype)
        s_cur_f32 = s_cur_mm.astype(jnp.float32)          # elementwise math in f32

        # Per-gate matmuls (g: 0=reset, 1=update, 2=transform).  Indexing the
        # leading gate axis of the stacked weights avoids all non-128-aligned
        # lane slicing of packed gate results.
        def msg_gate(g):
            return (jnp.dot(a_in, w_in_ref[g], preferred_element_type=jnp.float32)
                    + jnp.dot(a_out, w_out_ref[g], preferred_element_type=jnp.float32)
                    + b_ref[g])

        r = jax.nn.sigmoid(
            msg_gate(0) + jnp.dot(s_cur_mm, w_cur_ref[0],
                                  preferred_element_type=jnp.float32))
        z = jax.nn.sigmoid(
            msg_gate(1) + jnp.dot(s_cur_mm, w_cur_ref[1],
                                  preferred_element_type=jnp.float32))
        h_hat = jnp.tanh(
            msg_gate(2) + jnp.dot((r * s_cur_f32).astype(mm_dtype), w_cur_ref[2],
                                  preferred_element_type=jnp.float32))

        out = (1.0 - z) * s_cur_f32 + z * h_hat
        out_ref[...] = out.reshape(tb, n_node, d).astype(out_ref.dtype)


def _vmem_budget():
    """Physical-VMEM-aware working-set budget (v7x has only 64 MiB physical)."""
    phys = 64 * 1024 * 1024
    try:
        info = pltpu.get_tpu_info()
        phys = int(getattr(info, "vmem_capacity_bytes", phys))
    except Exception:
        pass
    budget = min(40 * 1024 * 1024, int(phys * 0.55))
    return budget, phys


def _vmem_limit(need_bytes, vmem_phys):
    lim = max(int(need_bytes * 1.25) + (2 << 20), 32 << 20)
    return int(min(lim, int(vmem_phys * 0.9)))


def _select_tiles(B, n_node, NE, D, in_isz, out_isz, budget_bytes, m_target=512):
    """Choose (TB, TK) = (batch tile, NE-reduction tile) plus the VMEM estimate.

    * TB*n_node targets ~m_target MXU rows but is capped by the VMEM budget.
    * The batch grid B//TB is kept even when possible so v7x's two TensorCores
      both stay fed on the "parallel" axis (harmless on single-TC v5e/v6e).
    * TK blocks the NE contraction so A / state tiles stay bounded for large
      graphs; TK is a multiple of 128 (or all of NE) so the BlockSpec can
      column-select out of the full A array without masked lane access.
    """
    if NE % 128 == 0:
        k_cands = [k for k in range(NE, 0, -128) if NE % k == 0]   # descending
    else:
        k_cands = [NE]

    if n_node % 8 == 0:
        tb_cands = [d for d in range(1, B + 1) if B % d == 0]
    else:
        tb_cands = [1]   # keep the in-kernel (TB, n_node, D) flatten a trivial squeeze

    row_align = 16 if in_isz == 2 else 8   # bf16 sublane tile is (16, 128)

    def bytes_needed(tb, tk):
        a_t = tb * n_node * tk * in_isz
        s_t = 2 * tb * tk * D * in_isz            # state_in + state_out tiles
        c_t = tb * n_node * D * in_isz            # state_cur tile
        o_t = tb * n_node * D * out_isz           # output tile
        wgt = 9 * D * D * in_isz + 3 * D * 4      # stacked gate weights + biases
        acc = 2 * tb * n_node * D * 4             # f32 message accumulators
        return 2 * (a_t + s_t + c_t + o_t + wgt) + acc   # x2: double buffering

    def rank(tb):
        g = B // tb
        rows = tb * n_node
        return (rows <= m_target,            # stay near the MXU M target
                g >= 2 and g % 2 == 0,       # even grid for v7x's two TCs
                rows % row_align == 0,       # sublane-aligned in-kernel flatten
                rows)                        # then: biggest tile

    for tb in sorted(tb_cands, key=rank, reverse=True):
        for tk in k_cands:
            need = bytes_needed(tb, tk)
            if need <= budget_bytes:
                return tb, tk, need

    # Nothing fits the budget: smallest legal tiles; vmem_limit_bytes is raised
    # to cover the estimate (may still spill for extreme n_node).
    # TODO(synk): add an n_node row-blocking grid axis so the A tile is bounded
    # even for very large graphs (the A tile still scales with n_node per K block).
    tb, tk = 1, k_cands[-1]
    return tb, tk, bytes_needed(tb, tk)


def propagator_forward(state_in, state_out, state_cur, A, params,
                       n_node, n_edge_types, *,
                       compute_dtype=jnp.float32, out_dtype=None):
    """Pallas TPU forward pass reproducing Propogator.forward.

    params = (wr, br, wz, bz, wt, bt) with w* of shape [3D, D] (x @ W layout),
    biases [1, D].  For best performance pass A / states already in
    `compute_dtype` (the casts below are then no-ops) and pre-pack the weights
    once per model instead of per call.
    """
    B, _, D = state_cur.shape
    NE = n_node * n_edge_types
    if out_dtype is None:
        out_dtype = state_cur.dtype
    wr, br, wz, bz, wt, bt = params

    in_isz = jnp.dtype(compute_dtype).itemsize
    out_isz = jnp.dtype(out_dtype).itemsize
    budget, vmem_phys = _vmem_budget()
    TB, TK, need = _select_tiles(B, n_node, NE, D, in_isz, out_isz, budget)

    # --- operand prep (no-ops when the caller already provides compute_dtype) ---
    if NE % 128 == 0:
        # Full A: the BlockSpec column blocks (width TK, block index k) select
        # only the first NE columns — no wrapper-side slice copy.
        A_op = A
    else:
        # Non-lane-aligned NE: fall back to the explicit slice so every block's
        # last dim equals the array extent (keeps the (8,128) rule satisfied).
        A_op = A[:, :, :NE]
    A_op = A_op.astype(compute_dtype)
    s_in = state_in.astype(compute_dtype)
    s_out = state_out.astype(compute_dtype)
    s_cur = state_cur.astype(compute_dtype)

    # Gate weights re-packed by *input* and stacked on a leading gate axis
    # (0=reset, 1=update, 2=transform) so the kernel never slices the lane dim.
    def stack_rows(lo, hi):
        return jnp.stack([wr[lo:hi], wz[lo:hi], wt[lo:hi]]).astype(compute_dtype)

    W_in = stack_rows(0, D)            # [3, D, D]  a_in            -> (r, z, h_hat)
    W_out = stack_rows(D, 2 * D)       # [3, D, D]  a_out           -> (r, z, h_hat)
    W_cur = stack_rows(2 * D, 3 * D)   # [3, D, D]  state_cur / r*state_cur
    b_all = jnp.stack([br, bz, bt]).astype(jnp.float32)   # [3, 1, D]

    grid = (B // TB, NE // TK)
    const3 = lambda shape: pl.BlockSpec(shape, lambda b, k: (0, 0, 0))

    out = pl.pallas_call(
        _propagator_kernel,
        out_shape=jax.ShapeDtypeStruct((B, n_node, D), out_dtype),
        grid_spec=pltpu.PrefetchScalarGridSpec(
            num_scalar_prefetch=0,
            grid=grid,
            in_specs=[
                pl.BlockSpec((TB, n_node, TK), lambda b, k: (b, 0, k)),   # A (first NE cols)
                pl.BlockSpec((TB, TK, D), lambda b, k: (b, k, 0)),        # state_in
                pl.BlockSpec((TB, TK, D), lambda b, k: (b, k, 0)),        # state_out
                pl.BlockSpec((TB, n_node, D), lambda b, k: (b, 0, 0)),    # state_cur
                const3((3, D, D)),    # W_in   (VMEM-resident: constant index_map)
                const3((3, D, D)),    # W_out
                const3((3, D, D)),    # W_cur
                const3((3, 1, D)),    # biases
            ],
            out_specs=pl.BlockSpec((TB, n_node, D), lambda b, k: (b, 0, 0)),
            scratch_shapes=[pltpu.VMEM((TB, n_node, D), jnp.float32),
                            pltpu.VMEM((TB, n_node, D), jnp.float32)],
        ),
        compiler_params=pltpu.CompilerParams(
            dimension_semantics=("parallel", "arbitrary"),
            vmem_limit_bytes=_vmem_limit(need, vmem_phys)),
    )(A_op, s_in, s_out, s_cur, W_in, W_out, W_cur, b_all)

    return out


def _xavier_uniform(key, in_dim, out_dim):
    # Matches torch.nn.init.xavier_uniform_ on an nn.Linear(in_dim, out_dim)
    # weight (fan_in=in_dim, fan_out=out_dim); returned as [in_dim, out_dim]
    # so the kernel computes x @ W.
    bound = jnp.sqrt(6.0 / (in_dim + out_dim))
    return jax.random.uniform(key, (in_dim, out_dim), jnp.float32,
                              minval=-bound, maxval=bound)


def _reference_forward(state_in, state_out, state_cur, A, params,
                       n_node, n_edge_types):
    """Plain-JAX reference mirroring the PyTorch code, for validation."""
    NE = n_node * n_edge_types
    wr, br, wz, bz, wt, bt = params
    A_in = A[:, :, :NE]                      # module uses the same slice for both
    a_in = jnp.einsum("bij,bjd->bid", A_in, state_in)
    a_out = jnp.einsum("bij,bjd->bid", A_in, state_out)
    a = jnp.concatenate([a_in, a_out, state_cur], axis=2)
    r = jax.nn.sigmoid(a @ wr + br)
    z = jax.nn.sigmoid(a @ wz + bz)
    joined = jnp.concatenate([a_in, a_out, r * state_cur], axis=2)
    h_hat = jnp.tanh(joined @ wt + bt)
    return (1.0 - z) * state_cur + z * h_hat


if __name__ == "__main__":
    # Small, deterministic problem sizes.
    B, state_dim, n_node, n_edge_types = 2, 32, 8, 2
    NE = n_node * n_edge_types

    key = jax.random.PRNGKey(0)
    k1, k2, k3, k4, kwr, kwz, kwt = jax.random.split(key, 7)

    state_in = jax.random.normal(k1, (B, NE, state_dim), jnp.float32)
    state_out = jax.random.normal(k2, (B, NE, state_dim), jnp.float32)
    state_cur = jax.random.normal(k3, (B, n_node, state_dim), jnp.float32)
    # A as produced by the usual GGNN pipeline: [B, n_node, 2 * n_node * n_edge_types]
    A = jax.random.normal(k4, (B, n_node, 2 * NE), jnp.float32)

    # Deterministic parameter init (xavier-uniform weights, zero biases).
    wr = _xavier_uniform(kwr, 3 * state_dim, state_dim)
    wz = _xavier_uniform(kwz, 3 * state_dim, state_dim)
    wt = _xavier_uniform(kwt, 3 * state_dim, state_dim)
    br = jnp.zeros((1, state_dim), jnp.float32)
    bz = jnp.zeros((1, state_dim), jnp.float32)
    bt = jnp.zeros((1, state_dim), jnp.float32)
    params = (wr, br, wz, bz, wt, bt)

    # --- f32 path: strict check against the reference -------------------------
    out = propagator_forward(state_in, state_out, state_cur, A, params,
                             n_node, n_edge_types)
    out = jax.block_until_ready(out)
    ref = _reference_forward(state_in, state_out, state_cur, A, params,
                             n_node, n_edge_types)
    assert out.shape == (B, n_node, state_dim)
    assert jnp.allclose(out, ref, atol=1e-4, rtol=1e-4), "f32 mismatch vs reference"

    # --- bf16 matmul-input path (v5e/v6e/v7x MXU-native), f32 accumulation ----
    out_b = propagator_forward(state_in, state_out, state_cur, A, params,
                               n_node, n_edge_types, compute_dtype=jnp.bfloat16)
    out_b = jax.block_until_ready(out_b)
    cast = lambda x: x.astype(jnp.bfloat16).astype(jnp.float32)
    params_b = (cast(wr), br, cast(wz), bz, cast(wt), bt)
    ref_b = _reference_forward(cast(state_in), cast(state_out), cast(state_cur),
                               cast(A), params_b, n_node, n_edge_types)
    assert out_b.shape == (B, n_node, state_dim)
    assert bool(jnp.all(jnp.isfinite(out_b)))
    assert jnp.allclose(out_b, ref_b, atol=2.5e-1, rtol=1e-1), "bf16 mismatch vs reference"

    print("KERNEL_OK")
</pallas_src>

<mosaic_0001>
module attributes {stable_mosaic.version = 11 : i64} {
  func.func @_propagator_kernel(%arg0: i32, %arg1: i32, %arg2: memref<1x8x16xf32, #tpu.memory_space<vmem>>, %arg3: memref<1x16x32xf32, #tpu.memory_space<vmem>>, %arg4: memref<1x16x32xf32, #tpu.memory_space<vmem>>, %arg5: memref<1x8x32xf32, #tpu.memory_space<vmem>>, %arg6: memref<3x32x32xf32, #tpu.memory_space<vmem>>, %arg7: memref<3x32x32xf32, #tpu.memory_space<vmem>>, %arg8: memref<3x32x32xf32, #tpu.memory_space<vmem>>, %arg9: memref<3x1x32xf32, #tpu.memory_space<vmem>>, %arg10: memref<1x8x32xf32, #tpu.memory_space<vmem>>, %arg11: memref<1x8x32xf32, #tpu.memory_space<vmem>>, %arg12: memref<1x8x32xf32, #tpu.memory_space<vmem>>) attributes {dimension_semantics = [#tpu.dimension_semantics<parallel>, #tpu.dimension_semantics<arbitrary>], iteration_bounds = array<i64: 2, 1>, scalar_prefetch = 0 : i64, scratch_operands = 2 : i64, tpu.core_type = #tpu.core_type<tc>, window_params = [{transform_indices = @transform_0, window_bounds = array<i64: 1, 8, 16>}, {transform_indices = @transform_1, window_bounds = array<i64: 1, 16, 32>}, {transform_indices = @transform_2, window_bounds = array<i64: 1, 16, 32>}, {transform_indices = @transform_3, window_bounds = array<i64: 1, 8, 32>}, {pipeline_mode = #tpu.pipeline_mode<synchronous>, transform_indices = @transform_4, window_bounds = array<i64: 3, 32, 32>}, {pipeline_mode = #tpu.pipeline_mode<synchronous>, transform_indices = @transform_5, window_bounds = array<i64: 3, 32, 32>}, {pipeline_mode = #tpu.pipeline_mode<synchronous>, transform_indices = @transform_6, window_bounds = array<i64: 3, 32, 32>}, {pipeline_mode = #tpu.pipeline_mode<synchronous>, transform_indices = @transform_7, window_bounds = array<i64: 3, 1, 32>}, {transform_indices = @transform_8, window_bounds = array<i64: 1, 8, 32>}]} {
    %c0_i32 = arith.constant 0 : i32
    %0 = arith.cmpi eq, %arg1, %c0_i32 : i32
    %1 = arith.extui %0 : i1 to i32
    %c0_i32_0 = arith.constant 0 : i32
    %2 = arith.cmpi ne, %1, %c0_i32_0 : i32
    scf.if %2 {
      %cst_24 = arith.constant 0.000000e+00 : f32
      %17 = vector.broadcast %cst_24 : f32 to vector<1x8x32xf32>
      %c0_25 = arith.constant 0 : index
      %c0_26 = arith.constant 0 : index
      %c0_27 = arith.constant 0 : index
      %18 = vector.load %arg11[%c0_25, %c0_26, %c0_27] : memref<1x8x32xf32, #tpu.memory_space<vmem>>, vector<1x8x32xf32>
      tpu.vector_store %arg11[%c0_25, %c0_26, %c0_27], %17 {strides = array<i32>} : memref<1x8x32xf32, #tpu.memory_space<vmem>>, vector<1x8x32xf32>,
      %cst_28 = arith.constant 0.000000e+00 : f32
      %19 = vector.broadcast %cst_28 : f32 to vector<1x8x32xf32>
      %c0_29 = arith.constant 0 : index
      %c0_30 = arith.constant 0 : index
      %c0_31 = arith.constant 0 : index
      %20 = vector.load %arg12[%c0_29, %c0_30, %c0_31] : memref<1x8x32xf32, #tpu.memory_space<vmem>>, vector<1x8x32xf32>
      tpu.vector_store %arg12[%c0_29, %c0_30, %c0_31], %19 {strides = array<i32>} : memref<1x8x32xf32, #tpu.memory_space<vmem>>, vector<1x8x32xf32>,
    } else {
    }
    %c0 = arith.constant 0 : index
    %c0_1 = arith.constant 0 : index
    %c0_2 = arith.constant 0 : index
    %3 = vector.load %arg2[%c0, %c0_1, %c0_2] : memref<1x8x16xf32, #tpu.memory_space<vmem>>, vector<1x8x16xf32>
    %c0_3 = arith.constant 0 : index
    %c0_4 = arith.constant 0 : index
    %c0_5 = arith.constant 0 : index
    %4 = vector.load %arg11[%c0_3, %c0_4, %c0_5] : memref<1x8x32xf32, #tpu.memory_space<vmem>>, vector<1x8x32xf32>
    %c0_6 = arith.constant 0 : index
    %c0_7 = arith.constant 0 : index
    %c0_8 = arith.constant 0 : index
    %5 = vector.load %arg3[%c0_6, %c0_7, %c0_8] : memref<1x16x32xf32, #tpu.memory_space<vmem>>, vector<1x16x32xf32>
    "tpu.trace_start"() <{level = 10 : i32, message = "bij,bjd->bid"}> : () -> ()
    %cst = arith.constant dense<0.000000e+00> : vector<1x8x32xf32>
    %6 = tpu.matmul %3, %5, %cst {dimension_numbers = #tpu.dot_dimension_numbers<[2], [1], [1], [2], [0, 0, 0, 1, 1, 2], [0], [0]>} : vector<1x8x16xf32>, vector<1x16x32xf32>, vector<1x8x32xf32> -> vector<1x8x32xf32>
    "tpu.trace_stop"() : () -> ()
    %7 = arith.addf %4, %6 : vector<1x8x32xf32>
    %c0_9 = arith.constant 0 : index
    %c0_10 = arith.constant 0 : index
    %c0_11 = arith.constant 0 : index
    %8 = vector.load %arg11[%c0_9, %c0_10, %c0_11] : memref<1x8x32xf32, #tpu.memory_space<vmem>>, vector<1x8x32xf32>
    tpu.vector_store %arg11[%c0_9, %c0_10, %c0_11], %7 {strides = array<i32>} : memref<1x8x32xf32, #tpu.memory_space<vmem>>, vector<1x8x32xf32>,
    %c0_12 = arith.constant 0 : index
    %c0_13 = arith.constant 0 : index
    %c0_14 = arith.constant 0 : index
    %9 = vector.load %arg12[%c0_12, %c0_13, %c0_14] : memref<1x8x32xf32, #tpu.memory_space<vmem>>, vector<1x8x32xf32>
    %c0_15 = arith.constant 0 : index
    %c0_16 = arith.constant 0 : index
    %c0_17 = arith.constant 0 : index
    %10 = vector.load %arg4[%c0_15, %c0_16, %c0_17] : memref<1x16x32xf32, #tpu.memory_space<vmem>>, vector<1x16x32xf32>
    "tpu.trace_start"() <{level = 10 : i32, message = "bij,bjd->bid"}> : () -> ()
    %cst_18 = arith.constant dense<0.000000e+00> : vector<1x8x32xf32>
    %11 = tpu.matmul %3, %10, %cst_18 {dimension_numbers = #tpu.dot_dimension_numbers<[2], [1], [1], [2], [0, 0, 0, 1, 1, 2], [0], [0]>} : vector<1x8x16xf32>, vector<1x16x32xf32>, vector<1x8x32xf32> -> vector<1x8x32xf32>
    "tpu.trace_stop"() : () -> ()
    %12 = arith.addf %9, %11 : vector<1x8x32xf32>
    %c0_19 = arith.constant 0 : index
    %c0_20 = arith.constant 0 : index
    %c0_21 = arith.constant 0 : index
    %13 = vector.load %arg12[%c0_19, %c0_20, %c0_21] : memref<1x8x32xf32, #tpu.memory_space<vmem>>, vector<1x8x32xf32>
    tpu.vector_store %arg12[%c0_19, %c0_20, %c0_21], %12 {strides = array<i32>} : memref<1x8x32xf32, #tpu.memory_space<vmem>>, vector<1x8x32xf32>,
    %c0_i32_22 = arith.constant 0 : i32
    %14 = arith.cmpi eq, %arg1, %c0_i32_22 : i32
    %15 = arith.extui %14 : i1 to i32
    %c0_i32_23 = arith.constant 0 : i32
    %16 = arith.cmpi ne, %15, %c0_i32_23 : i32
    scf.if %16 {
      %c0_24 = arith.constant 0 : index
      %c0_25 = arith.constant 0 : index
      %c0_26 = arith.constant 0 : index
      %17 = vector.load %arg11[%c0_24, %c0_25, %c0_26] : memref<1x8x32xf32, #tpu.memory_space<vmem>>, vector<1x8x32xf32>
      %18 = vector.shape_cast %17 : vector<1x8x32xf32> to vector<8x32xf32>
      %c0_27 = arith.constant 0 : index
      %c0_28 = arith.constant 0 : index
      %c0_29 = arith.constant 0 : index
      %19 = vector.load %arg12[%c0_27, %c0_28, %c0_29] : memref<1x8x32xf32, #tpu.memory_space<vmem>>, vector<1x8x32xf32>
      %20 = vector.shape_cast %19 : vector<1x8x32xf32> to vector<8x32xf32>
      %c0_30 = arith.constant 0 : index
      %c0_31 = arith.constant 0 : index
      %c0_32 = arith.constant 0 : index
      %21 = vector.load %arg5[%c0_30, %c0_31, %c0_32] : memref<1x8x32xf32, #tpu.memory_space<vmem>>, vector<1x8x32xf32>
      %22 = vector.shape_cast %21 : vector<1x8x32xf32> to vector<8x32xf32>
      %c0_33 = arith.constant 0 : index
      %c0_34 = arith.constant 0 : index
      %c0_35 = arith.constant 0 : index
      %23 = vector.load %arg6[%c0_33, %c0_34, %c0_35] : memref<3x32x32xf32, #tpu.memory_space<vmem>>, vector<1x32x32xf32>
      %24 = vector.shape_cast %23 : vector<1x32x32xf32> to vector<32x32xf32>
      %cst_36 = arith.constant dense<0.000000e+00> : vector<8x32xf32>
      %25 = tpu.matmul %18, %24, %cst_36 {dimension_numbers = #tpu.dot_dimension_numbers<[1], [0], [0], [1], [0, 0, 1, 1], [], []>} : vector<8x32xf32>, vector<32x32xf32>, vector<8x32xf32> -> vector<8x32xf32>
      %c0_37 = arith.constant 0 : index
      %c0_38 = arith.constant 0 : index
      %c0_39 = arith.constant 0 : index
      %26 = vector.load %arg7[%c0_37, %c0_38, %c0_39] : memref<3x32x32xf32, #tpu.memory_space<vmem>>, vector<1x32x32xf32>
      %27 = vector.shape_cast %26 : vector<1x32x32xf32> to vector<32x32xf32>
      %cst_40 = arith.constant dense<0.000000e+00> : vector<8x32xf32>
      %28 = tpu.matmul %20, %27, %cst_40 {dimension_numbers = #tpu.dot_dimension_numbers<[1], [0], [0], [1], [0, 0, 1, 1], [], []>} : vector<8x32xf32>, vector<32x32xf32>, vector<8x32xf32> -> vector<8x32xf32>
      %29 = arith.addf %25, %28 : vector<8x32xf32>
      %c0_41 = arith.constant 0 : index
      %c0_42 = arith.constant 0 : index
      %c0_43 = arith.constant 0 : index
      %30 = vector.load %arg9[%c0_41, %c0_42, %c0_43] : memref<3x1x32xf32, #tpu.memory_space<vmem>>, vector<1x1x32xf32>
      %31 = vector.shape_cast %30 : vector<1x1x32xf32> to vector<1x32xf32>
      %32 = vector.broadcast %31 : vector<1x32xf32> to vector<8x32xf32>
      %33 = arith.addf %29, %32 : vector<8x32xf32>
      %c0_44 = arith.constant 0 : index
      %c0_45 = arith.constant 0 : index
      %c0_46 = arith.constant 0 : index
      %34 = vector.load %arg8[%c0_44, %c0_45, %c0_46] : memref<3x32x32xf32, #tpu.memory_space<vmem>>, vector<1x32x32xf32>
      %35 = vector.shape_cast %34 : vector<1x32x32xf32> to vector<32x32xf32>
      %cst_47 = arith.constant dense<0.000000e+00> : vector<8x32xf32>
      %36 = tpu.matmul %22, %35, %cst_47 {dimension_numbers = #tpu.dot_dimension_numbers<[1], [0], [0], [1], [0, 0, 1, 1], [], []>} : vector<8x32xf32>, vector<32x32xf32>, vector<8x32xf32> -> vector<8x32xf32>
      %37 = arith.addf %33, %36 : vector<8x32xf32>
      %38 = arith.negf %37 : vector<8x32xf32>
      %39 = math.exp %38 : vector<8x32xf32>
      %cst_48 = arith.constant 1.000000e+00 : f32
      %40 = vector.broadcast %cst_48 : f32 to vector<8x32xf32>
      %41 = arith.addf %40, %39 : vector<8x32xf32>
      %42 = arith.divf %40, %41 : vector<8x32xf32>
      %c1 = arith.constant 1 : index
      %c0_49 = arith.constant 0 : index
      %c0_50 = arith.constant 0 : index
      %43 = vector.load %arg6[%c1, %c0_49, %c0_50] : memref<3x32x32xf32, #tpu.memory_space<vmem>>, vector<1x32x32xf32>
      %44 = vector.shape_cast %43 : vector<1x32x32xf32> to vector<32x32xf32>
      %cst_51 = arith.constant dense<0.000000e+00> : vector<8x32xf32>
      %45 = tpu.matmul %18, %44, %cst_51 {dimension_numbers = #tpu.dot_dimension_numbers<[1], [0], [0], [1], [0, 0, 1, 1], [], []>} : vector<8x32xf32>, vector<32x32xf32>, vector<8x32xf32> -> vector<8x32xf32>
      %c1_52 = arith.constant 1 : index
      %c0_53 = arith.constant 0 : index
      %c0_54 = arith.constant 0 : index
      %46 = vector.load %arg7[%c1_52, %c0_53, %c0_54] : memref<3x32x32xf32, #tpu.memory_space<vmem>>, vector<1x32x32xf32>
      %47 = vector.shape_cast %46 : vector<1x32x32xf32> to vector<32x32xf32>
      %cst_55 = arith.constant dense<0.000000e+00> : vector<8x32xf32>
      %48 = tpu.matmul %20, %47, %cst_55 {dimension_numbers = #tpu.dot_dimension_numbers<[1], [0], [0], [1], [0, 0, 1, 1], [], []>} : vector<8x32xf32>, vector<32x32xf32>, vector<8x32xf32> -> vector<8x32xf32>
      %49 = arith.addf %45, %48 : vector<8x32xf32>
      %c1_56 = arith.constant 1 : index
      %c0_57 = arith.constant 0 : index
      %c0_58 = arith.constant 0 : index
      %50 = vector.load %arg9[%c1_56, %c0_57, %c0_58] : memref<3x1x32xf32, #tpu.memory_space<vmem>>, vector<1x1x32xf32>
      %51 = vector.shape_cast %50 : vector<1x1x32xf32> to vector<1x32xf32>
      %52 = vector.broadcast %51 : vector<1x32xf32> to vector<8x32xf32>
      %53 = arith.addf %49, %52 : vector<8x32xf32>
      %c1_59 = arith.constant 1 : index
      %c0_60 = arith.constant 0 : index
      %c0_61 = arith.constant 0 : index
      %54 = vector.load %arg8[%c1_59, %c0_60, %c0_61] : memref<3x32x32xf32, #tpu.memory_space<vmem>>, vector<1x32x32xf32>
      %55 = vector.shape_cast %54 : vector<1x32x32xf32> to vector<32x32xf32>
      %cst_62 = arith.constant dense<0.000000e+00> : vector<8x32xf32>
      %56 = tpu.matmul %22, %55, %cst_62 {dimension_numbers = #tpu.dot_dimension_numbers<[1], [0], [0], [1], [0, 0, 1, 1], [], []>} : vector<8x32xf32>, vector<32x32xf32>, vector<8x32xf32> -> vector<8x32xf32>
      %57 = arith.addf %53, %56 : vector<8x32xf32>
      %58 = arith.negf %57 : vector<8x32xf32>
      %59 = math.exp %58 : vector<8x32xf32>
      %cst_63 = arith.constant 1.000000e+00 : f32
      %60 = vector.broadcast %cst_63 : f32 to vector<8x32xf32>
      %61 = arith.addf %60, %59 : vector<8x32xf32>
      %62 = arith.divf %60, %61 : vector<8x32xf32>
      %c2 = arith.constant 2 : index
      %c0_64 = arith.constant 0 : index
      %c0_65 = arith.constant 0 : index
      %63 = vector.load %arg6[%c2, %c0_64, %c0_65] : memref<3x32x32xf32, #tpu.memory_space<vmem>>, vector<1x32x32xf32>
      %64 = vector.shape_cast %63 : vector<1x32x32xf32> to vector<32x32xf32>
      %cst_66 = arith.constant dense<0.000000e+00> : vector<8x32xf32>
      %65 = tpu.matmul %18, %64, %cst_66 {dimension_numbers = #tpu.dot_dimension_numbers<[1], [0], [0], [1], [0, 0, 1, 1], [], []>} : vector<8x32xf32>, vector<32x32xf32>, vector<8x32xf32> -> vector<8x32xf32>
      %c2_67 = arith.constant 2 : index
      %c0_68 = arith.constant 0 : index
      %c0_69 = arith.constant 0 : index
      %66 = vector.load %arg7[%c2_67, %c0_68, %c0_69] : memref<3x32x32xf32, #tpu.memory_space<vmem>>, vector<1x32x32xf32>
      %67 = vector.shape_cast %66 : vector<1x32x32xf32> to vector<32x32xf32>
      %cst_70 = arith.constant dense<0.000000e+00> : vector<8x32xf32>
      %68 = tpu.matmul %20, %67, %cst_70 {dimension_numbers = #tpu.dot_dimension_numbers<[1], [0], [0], [1], [0, 0, 1, 1], [], []>} : vector<8x32xf32>, vector<32x32xf32>, vector<8x32xf32> -> vector<8x32xf32>
      %69 = arith.addf %65, %68 : vector<8x32xf32>
      %c2_71 = arith.constant 2 : index
      %c0_72 = arith.constant 0 : index
      %c0_73 = arith.constant 0 : index
      %70 = vector.load %arg9[%c2_71, %c0_72, %c0_73] : memref<3x1x32xf32, #tpu.memory_space<vmem>>, vector<1x1x32xf32>
      %71 = vector.shape_cast %70 : vector<1x1x32xf32> to vector<1x32xf32>
      %72 = vector.broadcast %71 : vector<1x32xf32> to vector<8x32xf32>
      %73 = arith.addf %69, %72 : vector<8x32xf32>
      %74 = arith.mulf %42, %22 : vector<8x32xf32>
      %c2_74 = arith.constant 2 : index
      %c0_75 = arith.constant 0 : index
      %c0_76 = arith.constant 0 : index
      %75 = vector.load %arg8[%c2_74, %c0_75, %c0_76] : memref<3x32x32xf32, #tpu.memory_space<vmem>>, vector<1x32x32xf32>
      %76 = vector.shape_cast %75 : vector<1x32x32xf32> to vector<32x32xf32>
      %cst_77 = arith.constant dense<0.000000e+00> : vector<8x32xf32>
      %77 = tpu.matmul %74, %76, %cst_77 {dimension_numbers = #tpu.dot_dimension_numbers<[1], [0], [0], [1], [0, 0, 1, 1], [], []>} : vector<8x32xf32>, vector<32x32xf32>, vector<8x32xf32> -> vector<8x32xf32>
      %78 = arith.addf %73, %77 : vector<8x32xf32>
      %79 = math.tanh %78 : vector<8x32xf32>
      %cst_78 = arith.constant 1.000000e+00 : f32
      %80 = vector.broadcast %cst_78 : f32 to vector<8x32xf32>
      %81 = arith.subf %80, %62 : vector<8x32xf32>
      %82 = arith.mulf %81, %22 : vector<8x32xf32>
      %83 = arith.mulf %62, %79 : vector<8x32xf32>
      %84 = arith.addf %82, %83 : vector<8x32xf32>
      %85 = vector.shape_cast %84 : vector<8x32xf32> to vector<1x8x32xf32>
      %c0_79 = arith.constant 0 : index
      %c0_80 = arith.constant 0 : index
      %c0_81 = arith.constant 0 : index
      %86 = vector.load %arg10[%c0_79, %c0_80, %c0_81] : memref<1x8x32xf32, #tpu.memory_space<vmem>>, vector<1x8x32xf32>
      tpu.vector_store %arg10[%c0_79, %c0_80, %c0_81], %85 {strides = array<i32>} : memref<1x8x32xf32, #tpu.memory_space<vmem>>, vector<1x8x32xf32>,
    } else {
    }
    return
  }
  func.func @transform_0(%arg0: i32, %arg1: i32) -> (i32, i32, i32) {
    %c0_i32 = arith.constant 0 : i32
    %c0_i32_0 = arith.constant 0 : i32
    return %arg0, %c0_i32, %arg1 : i32, i32, i32
  }
  func.func @transform_1(%arg0: i32, %arg1: i32) -> (i32, i32, i32) {
    %c0_i32 = arith.constant 0 : i32
    %c0_i32_0 = arith.constant 0 : i32
    return %arg0, %arg1, %c0_i32 : i32, i32, i32
  }
  func.func @transform_2(%arg0: i32, %arg1: i32) -> (i32, i32, i32) {
    %c0_i32 = arith.constant 0 : i32
    %c0_i32_0 = arith.constant 0 : i32
    return %arg0, %arg1, %c0_i32 : i32, i32, i32
  }
  func.func @transform_3(%arg0: i32, %arg1: i32) -> (i32, i32, i32) {
    %c0_i32 = arith.constant 0 : i32
    %c0_i32_0 = arith.constant 0 : i32
    %c0_i32_1 = arith.constant 0 : i32
    return %arg0, %c0_i32, %c0_i32_0 : i32, i32, i32
  }
  func.func @transform_4(%arg0: i32, %arg1: i32) -> (i32, i32, i32) {
    %c0_i32 = arith.constant 0 : i32
    %c0_i32_0 = arith.constant 0 : i32
    %c0_i32_1 = arith.constant 0 : i32
    %c0_i32_2 = arith.constant 0 : i32
    return %c0_i32, %c0_i32_0, %c0_i32_1 : i32, i32, i32
  }
  func.func @transform_5(%arg0: i32, %arg1: i32) -> (i32, i32, i32) {
    %c0_i32 = arith.constant 0 : i32
    %c0_i32_0 = arith.constant 0 : i32
    %c0_i32_1 = arith.constant 0 : i32
    %c0_i32_2 = arith.constant 0 : i32
    return %c0_i32, %c0_i32_0, %c0_i32_1 : i32, i32, i32
  }
  func.func @transform_6(%arg0: i32, %arg1: i32) -> (i32, i32, i32) {
    %c0_i32 = arith.constant 0 : i32
    %c0_i32_0 = arith.constant 0 : i32
    %c0_i32_1 = arith.constant 0 : i32
    %c0_i32_2 = arith.constant 0 : i32
    return %c0_i32, %c0_i32_0, %c0_i32_1 : i32, i32, i32
  }
  func.func @transform_7(%arg0: i32, %arg1: i32) -> (i32, i32, i32) {
    %c0_i32 = arith.constant 0 : i32
    %c0_i32_0 = arith.constant 0 : i32
    %c0_i32_1 = arith.constant 0 : i32
    %c0_i32_2 = arith.constant 0 : i32
    return %c0_i32, %c0_i32_0, %c0_i32_1 : i32, i32, i32
  }
  func.func @transform_8(%arg0: i32, %arg1: i32) -> (i32, i32, i32) {
    %c0_i32 = arith.constant 0 : i32
    %c0_i32_0 = arith.constant 0 : i32
    %c0_i32_1 = arith.constant 0 : i32
    return %arg0, %c0_i32, %c0_i32_0 : i32, i32, i32
  }
}

</mosaic_0001>

<llo_original>
// kernel: tpu_custom_call.1
$region0: #{tpu_custom_call.1}
  #allocation0 [shape = 'u32[]', space=smem, size = 0x4, offset = 0x4, fixed_abs, tag = 'smem constant byte address 0x4 - core index']
  #allocation1 [shape = 'u32[144,128]{1,0:T(1,128)}', space=vmem, size = 0x12000, scoped, tag = 'internal scratch']
  #allocation2 [shape = 'f32[1,8,32]{2,1,0:T(8,128)}', space=vmem, size = 0x1000, scoped, tag = 'scratch operand']
  #allocation3 [shape = 'f32[1,8,32]{2,1,0:T(8,128)}', space=vmem, size = 0x1000, scoped, tag = 'scratch operand']
  %s0 = inlined_call_operand.hbm [shape: f32[2,8,16], index: 0, kind: input, shape index: {}]
  %s1 = inlined_call_operand.hbm [shape: f32[2,16,32], index: 1, kind: input, shape index: {}]
  %s2 = inlined_call_operand.hbm [shape: f32[2,16,32], index: 2, kind: input, shape index: {}]
  %s3 = inlined_call_operand.hbm [shape: f32[2,8,32], index: 3, kind: input, shape index: {}]
  %s4 = inlined_call_operand.hbm [shape: f32[3,32,32], index: 4, kind: input, shape index: {}]
  %s5 = inlined_call_operand.hbm [shape: f32[3,32,32], index: 5, kind: input, shape index: {}]
  %s6 = inlined_call_operand.hbm [shape: f32[3,32,32], index: 6, kind: input, shape index: {}]
  %s7 = inlined_call_operand.vmem [shape: f32[3,1,32], index: 7, kind: input, shape index: {}]
  %s8 = inlined_call_operand.hbm [shape: f32[2,8,32], index: 8, kind: output, shape index: {}]
  %s9 = sld [smem:[#allocation0]]
  $region101: #{tpu_custom_call.1} parent=0
    _
  %s11 = ssub.s32 1, %s9
  %s12 = scalar_select 0, %s11, %s9
  $region1: #{tpu_custom_call.1} parent=0
    #allocation4 [shape = 'u8[8192]{0}', space=vmem, size = 0x2000, scoped, tag = 'input window, operand 0']
    #allocation5 [shape = 's32[2]{0}', space=sflag, size = 0x8, scoped, tag = 'scoped memory for tpu_custom_call.1']
    #allocation6 [shape = 's32[2]{0}', space=sflag, size = 0x8, scoped, tag = 'scoped memory for tpu_custom_call.1']
    #allocation7 [shape = 'u8[16384]{0}', space=vmem, size = 0x4000, scoped, tag = 'input window, operand 1']
    #allocation8 [shape = 's32[2]{0}', space=sflag, size = 0x8, scoped, tag = 'scoped memory for tpu_custom_call.1']
    #allocation9 [shape = 'u8[16384]{0}', space=vmem, size = 0x4000, scoped, tag = 'input window, operand 2']
    #allocation10 [shape = 'u8[8192]{0}', space=vmem, size = 0x2000, scoped, tag = 'input window, operand 3']
    #allocation11 [shape = 's32[2]{0}', space=sflag, size = 0x8, scoped, tag = 'scoped memory for tpu_custom_call.1']
    #allocation12 [shape = 'u8[49152]{0}', space=vmem, size = 0xc000, scoped, tag = 'input window, operand 4, single buffered']
    #allocation13 [shape = 'u8[49152]{0}', space=vmem, size = 0xc000, scoped, tag = 'input window, operand 5, single buffered']
    #allocation14 [shape = 's32[1]{0}', space=sflag, size = 0x4, scoped, tag = 'scoped memory for tpu_custom_call.1']
    #allocation15 [shape = 'u8[49152]{0}', space=vmem, size = 0xc000, scoped, tag = 'input window, operand 6, single buffered']
    #allocation16 [shape = 'u8[8192]{0}', space=vmem, size = 0x2000, scoped, tag = 'output window, operand 0']
    %13 = vsyncpa [#allocation5], 0
    %s14 = scalar_lea.sflag [#allocation5], 1
    %15 = vsyncpa %s14, 0
    %16 = vsyncpa [#allocation8], 0
    %s17 = scalar_lea.sflag [#allocation8], 1
    %18 = vsyncpa %s17, 0
    %19 = vsyncpa [#allocation11], 0
    %s20 = scalar_lea.sflag [#allocation11], 1
    %21 = vsyncpa %s20, 0
    %22 = vsyncpa [#allocation14], 0
    %23 = vsyncpa [#allocation6], 0
    %s24 = scalar_lea.sflag [#allocation6], 1
    %25 = vsyncpa %s24, 0
    loop: start=0, step=1, limit=4
    $region2: #{tpu_custom_call.1} parent=1 // loop_pre_header
      _
    $region3: #{tpu_custom_call.1} parent=1 // loop_header
      %s27 = sphi 0, %s31
      %p28 = scmp.ge.s32.totalorder %s27, 4
      %s34 = sphi 0, %s46
      %s35 = sphi 0, %s42
      %s36 = sphi 0, %s34
      %s37 = sphi 0, %s35
      %s38 = sphi 0, %s36
      %s39 = sphi 0, %s37
      %s51 = sphi 0, %s53
      %s54 = sphi 0, %s51
      %s55 = sphi 0, %s54
      %s71 = sphi 0, %s55
      %s79 = sphi 0, %s81
      %s82 = sphi 0, %s79
      %s83 = sphi 0, %s82
      %s99 = sphi 0, %s83
      %s107 = sphi 0, %s109
      %s110 = sphi 0, %s107
      %s111 = sphi 0, %s110
      %s127 = sphi 0, %s111
      %s133 = sphi 0, %s135
      %s136 = sphi 0, %s133
      %s137 = sphi 0, %s136
      %s153 = sphi 0, %s137
      %s157 = sphi 0, %s157
      %s159 = sphi 0, %s157
      %s160 = sphi 0, %s159
      %s174 = sphi 0, %s160
      %s178 = sphi 0, %s178
      %s180 = sphi 0, %s178
      %s181 = sphi 0, %s180
      %s195 = sphi 0, %s181
      %s199 = sphi 0, %s199
      %s201 = sphi 0, %s199
      %s202 = sphi 0, %s201
      %s216 = sphi 0, %s202
      %s220 = sphi 0, %s220
      %s222 = sphi 0, %s220
      %s223 = sphi 0, %s222
      %s237 = sphi 0, %s223
      %s243 = sphi 0, %s245
      %s246 = sphi 0, %s243
      %s247 = sphi 0, %s246
      %s263 = sphi 0, %s247
    $region4: #{tpu_custom_call.1} parent=1 // loop_header_branch
      %30 = sbr.rel (%p28) target = $region8
    $region5: #{tpu_custom_call.1} parent=1 // loop_body
      %s32 = ssub.s32 %s27, 1
      %s33 = ssub.s32 %s27, 2
      %s40 = sadd.s32 1, %s35
      %p41 = scmp.ge.s32.totalorder %s40, 1
      %s42 = scalar_select %p41, 0, %s40
      %s43 = sadd.s32 1, %s34
      %s44 = scalar_select %p41, %s43, %s34
      %p45 = scmp.ge.s32.totalorder %s44, 2
      %s46 = scalar_select %p45, 0, %s44
      %s47 = ssub.s32 %s34, %s46
      %s48 = ssub.s32 %s35, %s42
      %s49 = sor.u32 %s47, %s48
      %p50 = scmp.eq.s32.totalorder %s49, 0
      %s52 = sadd.s32 %s51, 1
      %s53 = scalar_select %p50, %s51, %s52
      %p56 = pneg %p50
      %p57 = scmp.eq.s32.totalorder %s27, 1
      %p58 = por %p56, %p57
      %p59 = scmp.ne.s32.totalorder %s51, %s54
      %p60 = scmp.eq.s32.totalorder %s27, 0
      %p61 = por %p59, %p60
      %p62 = scmp.ne.s32.totalorder %s51, %s54
      %p63 = scmp.eq.s32.totalorder %s32, 1
      %p64 = por %p62, %p63
      %p65 = scmp.ne.s32.totalorder %s54, %s55
      %p66 = scmp.eq.s32.totalorder %s32, 0
      %p67 = por %p65, %p66
      %p68 = scmp.ne.s32.totalorder %s54, %s55
      %p69 = scmp.eq.s32.totalorder %s33, 1
      %p70 = por %p68, %p69
      %p72 = scmp.ne.s32.totalorder %s55, %s71
      %p73 = scmp.eq.s32.totalorder %s33, 0
      %p74 = por %p72, %p73
      %s75 = ssub.s32 %s34, %s46
      %s76 = ssub.s32 %s35, %s42
      %s77 = sor.u32 %s75, %s76
      %p78 = scmp.eq.s32.totalorder %s77, 0
      %s80 = sadd.s32 %s79, 1
      %s81 = scalar_select %p78, %s79, %s80
      %p84 = pneg %p78
      %p85 = scmp.eq.s32.totalorder %s27, 1
      %p86 = por %p84, %p85
      %p87 = scmp.ne.s32.totalorder %s79, %s82
      %p88 = scmp.eq.s32.totalorder %s27, 0
      %p89 = por %p87, %p88
      %p90 = scmp.ne.s32.totalorder %s79, %s82
      %p91 = scmp.eq.s32.totalorder %s32, 1
      %p92 = por %p90, %p91
      %p93 = scmp.ne.s32.totalorder %s82, %s83
      %p94 = scmp.eq.s32.totalorder %s32, 0
      %p95 = por %p93, %p94
      %p96 = scmp.ne.s32.totalorder %s82, %s83
      %p97 = scmp.eq.s32.totalorder %s33, 1
      %p98 = por %p96, %p97
      %p100 = scmp.ne.s32.totalorder %s83, %s99
      %p101 = scmp.eq.s32.totalorder %s33, 0
      %p102 = por %p100, %p101
      %s103 = ssub.s32 %s34, %s46
      %s104 = ssub.s32 %s35, %s42
      %s105 = sor.u32 %s103, %s104
      %p106 = scmp.eq.s32.totalorder %s105, 0
      %s108 = sadd.s32 %s107, 1
      %s109 = scalar_select %p106, %s107, %s108
      %p112 = pneg %p106
      %p113 = scmp.eq.s32.totalorder %s27, 1
      %p114 = por %p112, %p113
      %p115 = scmp.ne.s32.totalorder %s107, %s110
      %p116 = scmp.eq.s32.totalorder %s27, 0
      %p117 = por %p115, %p116
      %p118 = scmp.ne.s32.totalorder %s107, %s110
      %p119 = scmp.eq.s32.totalorder %s32, 1
      %p120 = por %p118, %p119
      %p121 = scmp.ne.s32.totalorder %s110, %s111
      %p122 = scmp.eq.s32.totalorder %s32, 0
      %p123 = por %p121, %p122
      %p124 = scmp.ne.s32.totalorder %s110, %s111
      %p125 = scmp.eq.s32.totalorder %s33, 1
      %p126 = por %p124, %p125
      %p128 = scmp.ne.s32.totalorder %s111, %s127
      %p129 = scmp.eq.s32.totalorder %s33, 0
      %p130 = por %p128, %p129
      %s131 = ssub.s32 %s34, %s46
      %p132 = scmp.eq.s32.totalorder %s131, 0
      %s134 = sadd.s32 %s133, 1
      %s135 = scalar_select %p132, %s133, %s134
      %p138 = pneg %p132
      %p139 = scmp.eq.s32.totalorder %s27, 1
      %p140 = por %p138, %p139
      %p141 = scmp.ne.s32.totalorder %s133, %s136
      %p142 = scmp.eq.s32.totalorder %s27, 0
      %p143 = por %p141, %p142
      %p144 = scmp.ne.s32.totalorder %s133, %s136
      %p145 = scmp.eq.s32.totalorder %s32, 1
      %p146 = por %p144, %p145
      %p147 = scmp.ne.s32.totalorder %s136, %s137
      %p148 = scmp.eq.s32.totalorder %s32, 0
      %p149 = por %p147, %p148
      %p150 = scmp.ne.s32.totalorder %s136, %s137
      %p151 = scmp.eq.s32.totalorder %s33, 1
      %p152 = por %p150, %p151
      %p154 = scmp.ne.s32.totalorder %s137, %s153
      %p155 = scmp.eq.s32.totalorder %s33, 0
      %p156 = por %p154, %p155
      %s158 = sadd.s32 %s157, 1
      %p161 = scmp.eq.s32.totalorder %s27, 1
      %p162 = scmp.ne.s32.totalorder %s157, %s159
      %p163 = scmp.eq.s32.totalorder %s27, 0
      %p164 = por %p162, %p163
      %p165 = scmp.ne.s32.totalorder %s157, %s159
      %p166 = scmp.eq.s32.totalorder %s32, 1
      %p167 = por %p165, %p166
      %p168 = scmp.ne.s32.totalorder %s159, %s160
      %p169 = scmp.eq.s32.totalorder %s32, 0
      %p170 = por %p168, %p169
      %p171 = scmp.ne.s32.totalorder %s159, %s160
      %p172 = scmp.eq.s32.totalorder %s33, 1
      %p173 = por %p171, %p172
      %p175 = scmp.ne.s32.totalorder %s160, %s174
      %p176 = scmp.eq.s32.totalorder %s33, 0
      %p177 = por %p175, %p176
      %s179 = sadd.s32 %s178, 1
      %p182 = scmp.eq.s32.totalorder %s27, 1
      %p183 = scmp.ne.s32.totalorder %s178, %s180
      %p184 = scmp.eq.s32.totalorder %s27, 0
      %p185 = por %p183, %p184
      %p186 = scmp.ne.s32.totalorder %s178, %s180
      %p187 = scmp.eq.s32.totalorder %s32, 1
      %p188 = por %p186, %p187
      %p189 = scmp.ne.s32.totalorder %s180, %s181
      %p190 = scmp.eq.s32.totalorder %s32, 0
      %p191 = por %p189, %p190
      %p192 = scmp.ne.s32.totalorder %s180, %s181
      %p193 = scmp.eq.s32.totalorder %s33, 1
      %p194 = por %p192, %p193
      %p196 = scmp.ne.s32.totalorder %s181, %s195
      %p197 = scmp.eq.s32.totalorder %s33, 0
      %p198 = por %p196, %p197
      %s200 = sadd.s32 %s199, 1
      %p203 = scmp.eq.s32.totalorder %s27, 1
      %p204 = scmp.ne.s32.totalorder %s199, %s201
      %p205 = scmp.eq.s32.totalorder %s27, 0
      %p206 = por %p204, %p205
      %p207 = scmp.ne.s32.totalorder %s199, %s201
      %p208 = scmp.eq.s32.totalorder %s32, 1
      %p209 = por %p207, %p208
      %p210 = scmp.ne.s32.totalorder %s201, %s202
      %p211 = scmp.eq.s32.totalorder %s32, 0
      %p212 = por %p210, %p211
      %p213 = scmp.ne.s32.totalorder %s201, %s202
      %p214 = scmp.eq.s32.totalorder %s33, 1
      %p215 = por %p213, %p214
      %p217 = scmp.ne.s32.totalorder %s202, %s216
      %p218 = scmp.eq.s32.totalorder %s33, 0
      %p219 = por %p217, %p218
      %s221 = sadd.s32 %s220, 1
      %p224 = scmp.eq.s32.totalorder %s27, 1
      %p225 = scmp.ne.s32.totalorder %s220, %s222
      %p226 = scmp.eq.s32.totalorder %s27, 0
      %p227 = por %p225, %p226
      %p228 = scmp.ne.s32.totalorder %s220, %s222
      %p229 = scmp.eq.s32.totalorder %s32, 1
      %p230 = por %p228, %p229
      %p231 = scmp.ne.s32.totalorder %s222, %s223
      %p232 = scmp.eq.s32.totalorder %s32, 0
      %p233 = por %p231, %p232
      %p234 = scmp.ne.s32.totalorder %s222, %s223
      %p235 = scmp.eq.s32.totalorder %s33, 1
      %p236 = por %p234, %p235
      %p238 = scmp.ne.s32.totalorder %s223, %s237
      %p239 = scmp.eq.s32.totalorder %s33, 0
      %p240 = por %p238, %p239
      %s241 = ssub.s32 %s34, %s46
      %p242 = scmp.eq.s32.totalorder %s241, 0
      %s244 = sadd.s32 %s243, 1
      %s245 = scalar_select %p242, %s243, %s244
      %p248 = pneg %p242
      %p249 = scmp.eq.s32.totalorder %s27, 1
      %p250 = por %p248, %p249
      %p251 = scmp.ne.s32.totalorder %s243, %s246
      %p252 = scmp.eq.s32.totalorder %s27, 0
      %p253 = por %p251, %p252
      %p254 = scmp.ne.s32.totalorder %s243, %s246
      %p255 = scmp.eq.s32.totalorder %s32, 1
      %p256 = por %p254, %p255
      %p257 = scmp.ne.s32.totalorder %s246, %s247
      %p258 = scmp.eq.s32.totalorder %s32, 0
      %p259 = por %p257, %p258
      %p260 = scmp.ne.s32.totalorder %s246, %s247
      %p261 = scmp.eq.s32.totalorder %s33, 1
      %p262 = por %p260, %p261
      %p264 = scmp.ne.s32.totalorder %s247, %s263
      %p265 = scmp.eq.s32.totalorder %s33, 0
      %p266 = por %p264, %p265
      %p267 = scmp.le.s32.totalorder 1, %s27
      %p268 = scmp.lt.s32.totalorder %s27, 3
      %p269 = pnand %p267, %p268
      %p270 = pneg %p269
      // Predicated region
      $region9: #{tpu_custom_call.1} parent=5 // pred_check
        _
      $region10: #{tpu_custom_call.1} parent=5 // pred_check_branch
        %272 = sbr.rel (%p269) target = $region12
      $region11: #{tpu_custom_call.1} parent=5 // pred_region
        %s273 = ssub.s32 %s27, 1
        // Predicated region
        $region13: #{tpu_custom_call.1} parent=11 // pred_check
          %p274 = pneg %p170
        $region14: #{tpu_custom_call.1} parent=11 // pred_check_branch
          %276 = sbr.rel (%p274) target = $region16
        $region15: #{tpu_custom_call.1} parent=11 // pred_region
          %s278 = ssub.s32 1536, 1536
          %279 = vsyncadd [#allocation11], %s278
          %s280 = sshll.u32 [#allocation12], 4
          %s281 = int_to_ptr.vmem [resolvable:$true] %s280
          %286 = dma.hbm_to_vmem [thread:$0]  %s4, 1536, %s281, [#allocation11], 128, 128, 8
        $region16: #{tpu_custom_call.1} parent=11 // pred_fallthru
          _
        // Predicated region
        $region17: #{tpu_custom_call.1} parent=11 // pred_check
          %p287 = pneg %p191
        $region18: #{tpu_custom_call.1} parent=11 // pred_check_branch
          %289 = sbr.rel (%p287) target = $region20
        $region19: #{tpu_custom_call.1} parent=11 // pred_region
          %s291 = ssub.s32 1536, 1536
          %292 = vsyncadd [#allocation14], %s291
          %s293 = sshll.u32 [#allocation13], 4
          %s294 = int_to_ptr.vmem [resolvable:$true] %s293
          %299 = dma.hbm_to_vmem [thread:$0]  %s5, 1536, %s294, [#allocation14], 128, 128, 8
        $region20: #{tpu_custom_call.1} parent=11 // pred_fallthru
          _
        // Predicated region
        $region21: #{tpu_custom_call.1} parent=11 // pred_check
          %p300 = pneg %p212
        $region22: #{tpu_custom_call.1} parent=11 // pred_check_branch
          %302 = sbr.rel (%p300) target = $region24
        $region23: #{tpu_custom_call.1} parent=11 // pred_region
          %s304 = ssub.s32 1536, 1536
          %305 = vsyncadd [#allocation14], %s304
          %s306 = sshll.u32 [#allocation15], 4
          %s307 = int_to_ptr.vmem [resolvable:$true] %s306
          %312 = dma.hbm_to_vmem [thread:$0]  %s6, 1536, %s307, [#allocation14], 128, 128, 8
        $region24: #{tpu_custom_call.1} parent=11 // pred_fallthru
          _
        // Predicated region
        $region25: #{tpu_custom_call.1} parent=11 // pred_check
          %p313 = pneg %p233
        $region26: #{tpu_custom_call.1} parent=11 // pred_check_branch
          %315 = sbr.rel (%p313) target = $region28
        $region27: #{tpu_custom_call.1} parent=11 // pred_region
          _
        $region28: #{tpu_custom_call.1} parent=11 // pred_fallthru
          _
      $region12: #{tpu_custom_call.1} parent=5 // pred_fallthru
        _
      %p316 = scmp.lt.s32.totalorder %s27, 2
      // Predicated region
      $region29: #{tpu_custom_call.1} parent=5 // pred_check
        %p317 = pneg %p316
      $region30: #{tpu_custom_call.1} parent=5 // pred_check_branch
        %319 = sbr.rel (%p317) target = $region32
      $region31: #{tpu_custom_call.1} parent=5 // pred_region
        // Predicated region
        $region33: #{tpu_custom_call.1} parent=31 // pred_check
          %p320 = pneg %p61
        $region34: #{tpu_custom_call.1} parent=31 // pred_check_branch
          %322 = sbr.rel (%p320) target = $region36
        $region35: #{tpu_custom_call.1} parent=31 // pred_region
          %s323 = sand.u32 %s51, 1
          %s324 = scalar_lea.sflag [#allocation5], %s323
          %s325 = sand.u32 %s51, 1
          %s326 = smul.addr %s325, 8
          %s327 = scalar_lea.vmem [#allocation4], %s326
          %s329 = ssub.s32 128, 128
          %330 = vsyncadd %s324, %s329
          %s331 = sadd.s32 %s35, %s34
          %s332 = smul.addr %s331, 128
          %s333 = scalar_lea.hbm %s0, %s332
          %s335 = sshll.u32 %s327, 4
          %s336 = int_to_ptr.vmem [resolvable:$true] %s335
          %338 = dma.hbm_to_vmem [thread:$0]  %s333, 128, %s336, %s324
        $region36: #{tpu_custom_call.1} parent=31 // pred_fallthru
          _
        // Predicated region
        $region37: #{tpu_custom_call.1} parent=31 // pred_check
          %p339 = pneg %p89
        $region38: #{tpu_custom_call.1} parent=31 // pred_check_branch
          %341 = sbr.rel (%p339) target = $region40
        $region39: #{tpu_custom_call.1} parent=31 // pred_region
          %s342 = sand.u32 %s27, 1
          %s343 = scalar_lea.sflag [#allocation8], %s342
          %s344 = sand.u32 %s79, 1
          %s345 = smul.addr %s344, 16
          %s346 = scalar_lea.vmem [#allocation7], %s345
          %s347 = smul.u32 2, %s35
          %s349 = ssub.s32 256, 256
          %350 = vsyncadd %s343, %s349
          %s351 = smul.addr %s34, 2
          %s352 = sadd.s32 %s347, %s351
          %s353 = smul.addr %s352, 128
          %s354 = scalar_lea.hbm %s1, %s353
          %s355 = sshll.u32 %s346, 4
          %s356 = int_to_ptr.vmem [resolvable:$true] %s355
          %361 = dma.hbm_to_vmem [thread:$0]  %s354, 256, %s356, %s343, 128, 128, 8
        $region40: #{tpu_custom_call.1} parent=31 // pred_fallthru
          _
        // Predicated region
        $region41: #{tpu_custom_call.1} parent=31 // pred_check
          %p362 = pneg %p117
        $region42: #{tpu_custom_call.1} parent=31 // pred_check_branch
          %364 = sbr.rel (%p362) target = $region44
        $region43: #{tpu_custom_call.1} parent=31 // pred_region
          %s365 = sand.u32 %s27, 1
          %s366 = scalar_lea.sflag [#allocation8], %s365
          %s367 = sand.u32 %s107, 1
          %s368 = smul.addr %s367, 16
          %s369 = scalar_lea.vmem [#allocation9], %s368
          %s370 = smul.u32 2, %s35
          %s372 = ssub.s32 256, 256
          %373 = vsyncadd %s366, %s372
          %s374 = smul.addr %s34, 2
          %s375 = sadd.s32 %s370, %s374
          %s376 = smul.addr %s375, 128
          %s377 = scalar_lea.hbm %s2, %s376
          %s378 = sshll.u32 %s369, 4
          %s379 = int_to_ptr.vmem [resolvable:$true] %s378
          %384 = dma.hbm_to_vmem [thread:$0]  %s377, 256, %s379, %s366, 128, 128, 8
        $region44: #{tpu_custom_call.1} parent=31 // pred_fallthru
          _
        // Predicated region
        $region45: #{tpu_custom_call.1} parent=31 // pred_check
          %p385 = pneg %p143
        $region46: #{tpu_custom_call.1} parent=31 // pred_check_branch
          %387 = sbr.rel (%p385) target = $region48
        $region47: #{tpu_custom_call.1} parent=31 // pred_region
          %s388 = sand.u32 %s27, 1
          %s389 = scalar_lea.sflag [#allocation11], %s388
          %s390 = sand.u32 %s133, 1
          %s391 = smul.addr %s390, 8
          %s392 = scalar_lea.vmem [#allocation10], %s391
          %s394 = ssub.s32 128, 128
          %395 = vsyncadd %s389, %s394
          %s396 = smul.addr %s34, 128
          %s397 = scalar_lea.hbm %s3, %s396
          %s399 = sshll.u32 %s392, 4
          %s400 = int_to_ptr.vmem [resolvable:$true] %s399
          %402 = dma.hbm_to_vmem [thread:$0]  %s397, 128, %s400, %s389
        $region48: #{tpu_custom_call.1} parent=31 // pred_fallthru
          _
      $region32: #{tpu_custom_call.1} parent=5 // pred_fallthru
        _
      %p403 = scmp.le.s32.totalorder 1, %s27
      %p404 = scmp.lt.s32.totalorder %s27, 3
      %p405 = pnand %p403, %p404
      %p406 = pneg %p405
      // Predicated region
      $region49: #{tpu_custom_call.1} parent=5 // pred_check
        _
      $region50: #{tpu_custom_call.1} parent=5 // pred_check_branch
        %408 = sbr.rel (%p405) target = $region52
      $region51: #{tpu_custom_call.1} parent=5 // pred_region
        %s409 = ssub.s32 %s27, 1
        %s410 = sand.u32 %s54, 1
        %s411 = scalar_lea.sflag [#allocation5], %s410
        %s412 = sand.u32 %s54, 1
        %s413 = smul.addr %s412, 8
        %s414 = scalar_lea.vmem [#allocation4], %s413
        // Predicated region
        $region53: #{tpu_custom_call.1} parent=51 // pred_check
          %p415 = pneg %p67
        $region54: #{tpu_custom_call.1} parent=51 // pred_check_branch
          %417 = sbr.rel (%p415) target = $region56
        $region55: #{tpu_custom_call.1} parent=51 // pred_region
          %418 = dma.done %s411, 128
        $region56: #{tpu_custom_call.1} parent=51 // pred_fallthru
          _
        %s419 = sand.u32 %s32, 1
        %s420 = scalar_lea.sflag [#allocation8], %s419
        %s421 = sand.u32 %s82, 1
        %s422 = smul.addr %s421, 16
        %s423 = scalar_lea.vmem [#allocation7], %s422
        // Predicated region
        $region57: #{tpu_custom_call.1} parent=51 // pred_check
          %p424 = pneg %p95
        $region58: #{tpu_custom_call.1} parent=51 // pred_check_branch
          %426 = sbr.rel (%p424) target = $region60
        $region59: #{tpu_custom_call.1} parent=51 // pred_region
          %427 = dma.done %s420, 256
        $region60: #{tpu_custom_call.1} parent=51 // pred_fallthru
          _
        %s428 = sand.u32 %s32, 1
        %s429 = scalar_lea.sflag [#allocation8], %s428
        %s430 = sand.u32 %s110, 1
        %s431 = smul.addr %s430, 16
        %s432 = scalar_lea.vmem [#allocation9], %s431
        // Predicated region
        $region61: #{tpu_custom_call.1} parent=51 // pred_check
          %p433 = pneg %p123
        $region62: #{tpu_custom_call.1} parent=51 // pred_check_branch
          %435 = sbr.rel (%p433) target = $region64
        $region63: #{tpu_custom_call.1} parent=51 // pred_region
          %436 = dma.done %s429, 256
        $region64: #{tpu_custom_call.1} parent=51 // pred_fallthru
          _
        %s437 = sand.u32 %s32, 1
        %s438 = scalar_lea.sflag [#allocation11], %s437
        %s439 = sand.u32 %s136, 1
        %s440 = smul.addr %s439, 8
        %s441 = scalar_lea.vmem [#allocation10], %s440
        // Predicated region
        $region65: #{tpu_custom_call.1} parent=51 // pred_check
          %p442 = pneg %p149
        $region66: #{tpu_custom_call.1} parent=51 // pred_check_branch
          %444 = sbr.rel (%p442) target = $region68
        $region67: #{tpu_custom_call.1} parent=51 // pred_region
          %445 = dma.done %s438, 128
        $region68: #{tpu_custom_call.1} parent=51 // pred_fallthru
          _
        // Predicated region
        $region69: #{tpu_custom_call.1} parent=51 // pred_check
          %p446 = pneg %p170
        $region70: #{tpu_custom_call.1} parent=51 // pred_check_branch
          %448 = sbr.rel (%p446) target = $region72
        $region71: #{tpu_custom_call.1} parent=51 // pred_region
          %449 = dma.done [#allocation11], 1536
        $region72: #{tpu_custom_call.1} parent=51 // pred_fallthru
          _
        // Predicated region
        $region73: #{tpu_custom_call.1} parent=51 // pred_check
          %p450 = pneg %p191
        $region74: #{tpu_custom_call.1} parent=51 // pred_check_branch
          %452 = sbr.rel (%p450) target = $region76
        $region75: #{tpu_custom_call.1} parent=51 // pred_region
          %453 = dma.done [#allocation14], 1536
        $region76: #{tpu_custom_call.1} parent=51 // pred_fallthru
          _
        // Predicated region
        $region77: #{tpu_custom_call.1} parent=51 // pred_check
          %p454 = pneg %p212
        $region78: #{tpu_custom_call.1} parent=51 // pred_check_branch
          %456 = sbr.rel (%p454) target = $region80
        $region79: #{tpu_custom_call.1} parent=51 // pred_region
          %457 = dma.done [#allocation14], 1536
        $region80: #{tpu_custom_call.1} parent=51 // pred_fallthru
          _
        %s458 = sand.u32 %s54, 1
        %s459 = scalar_lea.sflag [#allocation5], %s458
        %s460 = sand.u32 %s54, 1
        %s461 = smul.addr %s460, 8
        %s462 = scalar_lea.vmem [#allocation4], %s461
        %p463 = pneg %p67
        %p464 = pneg %p64
        %s465 = sand.u32 %s32, 1
        %s466 = scalar_lea.sflag [#allocation8], %s465
        %s467 = sand.u32 %s82, 1
        %s468 = smul.addr %s467, 16
        %s469 = scalar_lea.vmem [#allocation7], %s468
        %p470 = pneg %p95
        %p471 = pneg %p92
        %s472 = sand.u32 %s32, 1
        %s473 = scalar_lea.sflag [#allocation8], %s472
        %s474 = sand.u32 %s110, 1
        %s475 = smul.addr %s474, 16
        %s476 = scalar_lea.vmem [#allocation9], %s475
        %p477 = pneg %p123
        %p478 = pneg %p120
        %s479 = sand.u32 %s32, 1
        %s480 = scalar_lea.sflag [#allocation11], %s479
        %s481 = sand.u32 %s136, 1
        %s482 = smul.addr %s481, 8
        %s483 = scalar_lea.vmem [#allocation10], %s482
        %p484 = pneg %p149
        %p485 = pneg %p146
        %p486 = pneg %p170
        %p487 = pneg %p167
        %p488 = pneg %p191
        %p489 = pneg %p188
        %p490 = pneg %p212
        %p491 = pneg %p209
        %p492 = pneg %p233
        %p493 = pneg %p230
        %p494 = pneg %p259
        %p495 = pneg %p256
        %s496 = sand.u32 %s246, 1
        %s497 = scalar_lea.sflag [#allocation6], %s496
        %s498 = sand.u32 %s246, 1
        %s499 = smul.addr %s498, 8
        %s500 = scalar_lea.vmem [#allocation16], %s499
        %s501 = smul.u32 2, %s37
        %s502 = smul.u32 2, %s37
        %p503 = scmp.eq.s32.totalorder %s37, 0
        // Predicated region
        $region81: #{tpu_custom_call.1} parent=51 // pred_check
          %p504 = pneg %p503
        $region82: #{tpu_custom_call.1} parent=51 // pred_check_branch
          %506 = sbr.rel (%p504) target = $region84
        $region83: #{tpu_custom_call.1} parent=51 // pred_region
          %vm507 = vcmask 261120
          %508 = vst.msk [vmem:[#allocation2] sm:$0xff] %vm507, 0.0
          %509 = vst.msk [vmem:[#allocation3] sm:$0xff] %vm507, 0.0
        $region84: #{tpu_custom_call.1} parent=51 // pred_fallthru
          _
        %v510 = vld [vmem:[%s414] sm:$0xff]
        %v511 = vld [vmem:[#allocation2] sm:$0xff]
        %v512 = vld [vmem:[%s423] sm:$0xff]
        %v513 = vld [vmem:[%s423 + $0x8] sm:$0xff]
        %vm514 = vcmask 130048
        %v516 = vsel %vm514, %v510, 0
        %518 = vmatprep.subr.mxu0 0.0
        %519 = vmatpush1.msra.mxu0 %v512
        %520 = vmatprep.subr.mxu0 0.0
        %521 = vmatpush1.msra.mxu0 %v513
        %522 = vmatprep.subr.mxu0 0.0
        %523 = vmatpush1.msra.mxu0 0.0
        %524 = vmatprep.subr.mxu0 0.0
        %525 = vmatpush1.msra.mxu0 0.0
        %526 = vmatprep.subr.mxu0 0.0
        %527 = vmatpush1.msra.mxu0 0.0
        %528 = vmatprep.subr.mxu0 0.0
        %529 = vmatpush1.msra.mxu0 0.0
        %530 = vmatprep.subr.mxu0 0.0
        %531 = vmatpush1.msra.mxu0 0.0
        %532 = vmatprep.subr.mxu0 0.0
        %533 = vmatpush1.msra.mxu0 0.0
        %534 = vmatprep.subr.mxu0 0.0
        %535 = vmatpush1.msra.mxu0 0.0
        %536 = vmatprep.subr.mxu0 0.0
        %537 = vmatpush1.msra.mxu0 0.0
        %538 = vmatprep.subr.mxu0 0.0
        %539 = vmatpush1.msra.mxu0 0.0
        %540 = vmatprep.subr.mxu0 0.0
        %541 = vmatpush1.msra.mxu0 0.0
        %542 = vmatprep.subr.mxu0 0.0
        %543 = vmatpush1.msra.mxu0 0.0
        %544 = vmatprep.subr.mxu0 0.0
        %545 = vmatpush1.msra.mxu0 0.0
        %546 = vmatprep.subr.mxu0 0.0
        %547 = vmatpush1.msra.mxu0 0.0
        %548 = vmatprep.subr.mxu0 0.0
        %549 = vmatpush1.msra.mxu0 0.0
        %550 = vmatprep.subr.mxu0 0.0
        %551 = vmatpush1.msra.mxu0 0.0
        %552 = vmatprep.subr.mxu0 0.0
        %553 = vmatpush1.msra.mxu0 0.0
        %554 = vmatprep.subr.mxu0 0.0
        %555 = vmatpush1.msra.mxu0 0.0
        %556 = vmatprep.subr.mxu0 0.0
        %557 = vmatpush1.msra.mxu0 0.0
        %558 = vmatprep.subr.mxu0 0.0
        %559 = vmatpush1.msra.mxu0 0.0
        %560 = vmatprep.subr.mxu0 0.0
        %561 = vmatpush1.msra.mxu0 0.0
        %562 = vmatprep.subr.mxu0 0.0
        %563 = vmatpush1.msra.mxu0 0.0
        %564 = vmatprep.subr.mxu0 0.0
        %565 = vmatpush1.msra.mxu0 0.0
        %566 = vmatprep.subr.mxu0 0.0
        %567 = vmatpush1.msra.mxu0 0.0
        %568 = vmatprep.subr.mxu0 0.0
        %569 = vmatpush1.msra.mxu0 0.0
        %570 = vmatprep.subr.mxu0 0.0
        %571 = vmatpush1.msra.mxu0 0.0
        %572 = vmatprep.subr.mxu0 0.0
        %573 = vmatpush1.msra.mxu0 0.0
        %574 = vmatprep.subr.mxu0 0.0
        %575 = vmatpush1.msra.mxu0 0.0
        %576 = vmatprep.subr.mxu0 0.0
        %577 = vmatpush1.msra.mxu0 0.0
        %578 = vmatprep.subr.mxu0 0.0
        %579 = vmatpush1.msra.mxu0 0.0
        %580 = vmatprep.subr.mxu0 0.0
        %581 = vmatpush1.msra.mxu0 0.0
        %582 = vmatprep.mubr.f32.mxu0 0.0
        %583 = vmatmul.mubr.f32.gmra.mrb[0].mxu0 %v516
        %v584 = vpop.f32.mrb[0].mxu0
        %v585 = vadd.f32 0.0, %v584
        %v586 = vpop.f32.mrb[0].mxu0
        %587 = vdwg.mxu0
        %v588 = vadd.f32 %v511, %v585
        %vm589 = vcmask 261120
        %590 = vst.msk [vmem:[#allocation2] sm:$0xff] %vm589, %v588
        %v591 = vld [vmem:[#allocation3] sm:$0xff]
        %v592 = vld [vmem:[%s432] sm:$0xff]
        %v593 = vld [vmem:[%s432 + $0x8] sm:$0xff]
        %594 = vmatprep.subr.mxu0 0.0
        %595 = vmatpush1.msra.mxu0 %v592
        %596 = vmatprep.subr.mxu0 0.0
        %597 = vmatpush1.msra.mxu0 %v593
        %598 = vmatprep.subr.mxu0 0.0
        %599 = vmatpush1.msra.mxu0 0.0
        %600 = vmatprep.subr.mxu0 0.0
        %601 = vmatpush1.msra.mxu0 0.0
        %602 = vmatprep.subr.mxu0 0.0
        %603 = vmatpush1.msra.mxu0 0.0
        %604 = vmatprep.subr.mxu0 0.0
        %605 = vmatpush1.msra.mxu0 0.0
        %606 = vmatprep.subr.mxu0 0.0
        %607 = vmatpush1.msra.mxu0 0.0
        %608 = vmatprep.subr.mxu0 0.0
        %609 = vmatpush1.msra.mxu0 0.0
        %610 = vmatprep.subr.mxu0 0.0
        %611 = vmatpush1.msra.mxu0 0.0
        %612 = vmatprep.subr.mxu0 0.0
        %613 = vmatpush1.msra.mxu0 0.0
        %614 = vmatprep.subr.mxu0 0.0
        %615 = vmatpush1.msra.mxu0 0.0
        %616 = vmatprep.subr.mxu0 0.0
        %617 = vmatpush1.msra.mxu0 0.0
        %618 = vmatprep.subr.mxu0 0.0
        %619 = vmatpush1.msra.mxu0 0.0
        %620 = vmatprep.subr.mxu0 0.0
        %621 = vmatpush1.msra.mxu0 0.0
        %622 = vmatprep.subr.mxu0 0.0
        %623 = vmatpush1.msra.mxu0 0.0
        %624 = vmatprep.subr.mxu0 0.0
        %625 = vmatpush1.msra.mxu0 0.0
        %626 = vmatprep.subr.mxu0 0.0
        %627 = vmatpush1.msra.mxu0 0.0
        %628 = vmatprep.subr.mxu0 0.0
        %629 = vmatpush1.msra.mxu0 0.0
        %630 = vmatprep.subr.mxu0 0.0
        %631 = vmatpush1.msra.mxu0 0.0
        %632 = vmatprep.subr.mxu0 0.0
        %633 = vmatpush1.msra.mxu0 0.0
        %634 = vmatprep.subr.mxu0 0.0
        %635 = vmatpush1.msra.mxu0 0.0
        %636 = vmatprep.subr.mxu0 0.0
        %637 = vmatpush1.msra.mxu0 0.0
        %638 = vmatprep.subr.mxu0 0.0
        %639 = vmatpush1.msra.mxu0 0.0
        %640 = vmatprep.subr.mxu0 0.0
        %641 = vmatpush1.msra.mxu0 0.0
        %642 = vmatprep.subr.mxu0 0.0
        %643 = vmatpush1.msra.mxu0 0.0
        %644 = vmatprep.subr.mxu0 0.0
        %645 = vmatpush1.msra.mxu0 0.0
        %646 = vmatprep.subr.mxu0 0.0
        %647 = vmatpush1.msra.mxu0 0.0
        %648 = vmatprep.subr.mxu0 0.0
        %649 = vmatpush1.msra.mxu0 0.0
        %650 = vmatprep.subr.mxu0 0.0
        %651 = vmatpush1.msra.mxu0 0.0
        %652 = vmatprep.subr.mxu0 0.0
        %653 = vmatpush1.msra.mxu0 0.0
        %654 = vmatprep.subr.mxu0 0.0
        %655 = vmatpush1.msra.mxu0 0.0
        %656 = vmatprep.subr.mxu0 0.0
        %657 = vmatpush1.msra.mxu0 0.0
        %658 = vmatprep.mubr.f32.mxu0 0.0
        %659 = vmatmul.mubr.f32.gmra.mrb[0].mxu0 %v516
        %v660 = vpop.f32.mrb[0].mxu0
        %v661 = vadd.f32 0.0, %v660
        %v662 = vpop.f32.mrb[0].mxu0
        %663 = vdwg.mxu0
        %v664 = vadd.f32 %v591, %v661
        %665 = vst.msk [vmem:[#allocation3] sm:$0xff] %vm589, %v664
        // Predicated region
        $region85: #{tpu_custom_call.1} parent=51 // pred_check
          %p666 = pneg %p503
        $region86: #{tpu_custom_call.1} parent=51 // pred_check_branch
          %668 = sbr.rel (%p666) target = $region88
        $region87: #{tpu_custom_call.1} parent=51 // pred_region
          %v669 = vld [vmem:[#allocation2] sm:$0xff]
          %v670 = vld [vmem:[#allocation3] sm:$0xff]
          %v671 = vld [vmem:[%s441] sm:$0xff]
          %v672 = vld [vmem:[#allocation12] sm:$0xff]
          %v673 = vld [vmem:[#allocation12 + $0x8] sm:$0xff]
          %v674 = vld [vmem:[#allocation12 + $0x10] sm:$0xff]
          %v675 = vld [vmem:[#allocation12 + $0x18] sm:$0xff]
          %v676 = vld [vmem:[#allocation13] sm:$0xff]
          %v677 = vld [vmem:[#allocation13 + $0x8] sm:$0xff]
          %v678 = vld [vmem:[#allocation13 + $0x10] sm:$0xff]
          %v679 = vld [vmem:[#allocation13 + $0x18] sm:$0xff]
          %v681 = vsel %vm589, %v670, 0
          %683 = vmatprep.subr.mxu0 0.0
          %684 = vmatpush1.msra.mxu0 %v676
          %685 = vmatprep.subr.mxu0 0.0
          %686 = vmatpush1.msra.mxu0 %v677
          %687 = vmatprep.subr.mxu0 0.0
          %688 = vmatpush1.msra.mxu0 %v678
          %689 = vmatprep.subr.mxu0 0.0
          %690 = vmatpush1.msra.mxu0 %v679
          %691 = vmatprep.subr.mxu0 0.0
          %692 = vmatpush1.msra.mxu0 0.0
          %693 = vmatprep.subr.mxu0 0.0
          %694 = vmatpush1.msra.mxu0 0.0
          %695 = vmatprep.subr.mxu0 0.0
          %696 = vmatpush1.msra.mxu0 0.0
          %697 = vmatprep.subr.mxu0 0.0
          %698 = vmatpush1.msra.mxu0 0.0
          %699 = vmatprep.subr.mxu0 0.0
          %700 = vmatpush1.msra.mxu0 0.0
          %701 = vmatprep.subr.mxu0 0.0
          %702 = vmatpush1.msra.mxu0 0.0
          %703 = vmatprep.subr.mxu0 0.0
          %704 = vmatpush1.msra.mxu0 0.0
          %705 = vmatprep.subr.mxu0 0.0
          %706 = vmatpush1.msra.mxu0 0.0
          %707 = vmatprep.subr.mxu0 0.0
          %708 = vmatpush1.msra.mxu0 0.0
          %709 = vmatprep.subr.mxu0 0.0
          %710 = vmatpush1.msra.mxu0 0.0
          %711 = vmatprep.subr.mxu0 0.0
          %712 = vmatpush1.msra.mxu0 0.0
          %713 = vmatprep.subr.mxu0 0.0
          %714 = vmatpush1.msra.mxu0 0.0
          %715 = vmatprep.subr.mxu0 0.0
          %716 = vmatpush1.msra.mxu0 0.0
          %717 = vmatprep.subr.mxu0 0.0
          %718 = vmatpush1.msra.mxu0 0.0
          %719 = vmatprep.subr.mxu0 0.0
          %720 = vmatpush1.msra.mxu0 0.0
          %721 = vmatprep.subr.mxu0 0.0
          %722 = vmatpush1.msra.mxu0 0.0
          %723 = vmatprep.subr.mxu0 0.0
          %724 = vmatpush1.msra.mxu0 0.0
          %725 = vmatprep.subr.mxu0 0.0
          %726 = vmatpush1.msra.mxu0 0.0
          %727 = vmatprep.subr.mxu0 0.0
          %728 = vmatpush1.msra.mxu0 0.0
          %729 = vmatprep.subr.mxu0 0.0
          %730 = vmatpush1.msra.mxu0 0.0
          %731 = vmatprep.subr.mxu0 0.0
          %732 = vmatpush1.msra.mxu0 0.0
          %733 = vmatprep.subr.mxu0 0.0
          %734 = vmatpush1.msra.mxu0 0.0
          %735 = vmatprep.subr.mxu0 0.0
          %736 = vmatpush1.msra.mxu0 0.0
          %737 = vmatprep.subr.mxu0 0.0
          %738 = vmatpush1.msra.mxu0 0.0
          %739 = vmatprep.subr.mxu0 0.0
          %740 = vmatpush1.msra.mxu0 0.0
          %741 = vmatprep.subr.mxu0 0.0
          %742 = vmatpush1.msra.mxu0 0.0
          %743 = vmatprep.subr.mxu0 0.0
          %744 = vmatpush1.msra.mxu0 0.0
          %745 = vmatprep.subr.mxu0 0.0
          %746 = vmatpush1.msra.mxu0 0.0
          %747 = vmatprep.mubr.f32.mxu0 0.0
          %748 = vmatmul.mubr.f32.gmra.mrb[0].mxu0 %v681
          %v749 = vpop.f32.mrb[0].mxu0
          %v750 = vadd.f32 0.0, %v749
          %v751 = vpop.f32.mrb[0].mxu0
          %752 = vdwg.mxu0
          %v754 = vsel %vm589, %v669, 0
          %756 = vmatprep.subr.mxu0 0.0
          %757 = vmatpush1.msra.mxu0 %v672
          %758 = vmatprep.subr.mxu0 0.0
          %759 = vmatpush1.msra.mxu0 %v673
          %760 = vmatprep.subr.mxu0 0.0
          %761 = vmatpush1.msra.mxu0 %v674
          %762 = vmatprep.subr.mxu0 0.0
          %763 = vmatpush1.msra.mxu0 %v675
          %764 = vmatprep.subr.mxu0 0.0
          %765 = vmatpush1.msra.mxu0 0.0
          %766 = vmatprep.subr.mxu0 0.0
          %767 = vmatpush1.msra.mxu0 0.0
          %768 = vmatprep.subr.mxu0 0.0
          %769 = vmatpush1.msra.mxu0 0.0
          %770 = vmatprep.subr.mxu0 0.0
          %771 = vmatpush1.msra.mxu0 0.0
          %772 = vmatprep.subr.mxu0 0.0
          %773 = vmatpush1.msra.mxu0 0.0
          %774 = vmatprep.subr.mxu0 0.0
          %775 = vmatpush1.msra.mxu0 0.0
          %776 = vmatprep.subr.mxu0 0.0
          %777 = vmatpush1.msra.mxu0 0.0
          %778 = vmatprep.subr.mxu0 0.0
          %779 = vmatpush1.msra.mxu0 0.0
          %780 = vmatprep.subr.mxu0 0.0
          %781 = vmatpush1.msra.mxu0 0.0
          %782 = vmatprep.subr.mxu0 0.0
          %783 = vmatpush1.msra.mxu0 0.0
          %784 = vmatprep.subr.mxu0 0.0
          %785 = vmatpush1.msra.mxu0 0.0
          %786 = vmatprep.subr.mxu0 0.0
          %787 = vmatpush1.msra.mxu0 0.0
          %788 = vmatprep.subr.mxu0 0.0
          %789 = vmatpush1.msra.mxu0 0.0
          %790 = vmatprep.subr.mxu0 0.0
          %791 = vmatpush1.msra.mxu0 0.0
          %792 = vmatprep.subr.mxu0 0.0
          %793 = vmatpush1.msra.mxu0 0.0
          %794 = vmatprep.subr.mxu0 0.0
          %795 = vmatpush1.msra.mxu0 0.0
          %796 = vmatprep.subr.mxu0 0.0
          %797 = vmatpush1.msra.mxu0 0.0
          %798 = vmatprep.subr.mxu0 0.0
          %799 = vmatpush1.msra.mxu0 0.0
          %800 = vmatprep.subr.mxu0 0.0
          %801 = vmatpush1.msra.mxu0 0.0
          %802 = vmatprep.subr.mxu0 0.0
          %803 = vmatpush1.msra.mxu0 0.0
          %804 = vmatprep.subr.mxu0 0.0
          %805 = vmatpush1.msra.mxu0 0.0
          %806 = vmatprep.subr.mxu0 0.0
          %807 = vmatpush1.msra.mxu0 0.0
          %808 = vmatprep.subr.mxu0 0.0
          %809 = vmatpush1.msra.mxu0 0.0
          %810 = vmatprep.subr.mxu0 0.0
          %811 = vmatpush1.msra.mxu0 0.0
          %812 = vmatprep.subr.mxu0 0.0
          %813 = vmatpush1.msra.mxu0 0.0
          %814 = vmatprep.subr.mxu0 0.0
          %815 = vmatpush1.msra.mxu0 0.0
          %816 = vmatprep.subr.mxu0 0.0
          %817 = vmatpush1.msra.mxu0 0.0
          %818 = vmatprep.subr.mxu0 0.0
          %819 = vmatpush1.msra.mxu0 0.0
          %820 = vmatprep.mubr.f32.mxu0 0.0
          %821 = vmatmul.mubr.f32.gmra.mrb[0].mxu0 %v754
          %v822 = vpop.f32.mrb[0].mxu0
          %v823 = vadd.f32 %v750, %v822
          %v824 = vpop.f32.mrb[0].mxu0
          %825 = vdwg.mxu0
          %v826 = vld [vmem:[%s7] sm:$0x1]
          %v828 = vlaneseq
          %v829 = vshrl.u32 %v828, 7
          %v830 = vsub.s32 0, %v829
          %v831 = vrot.slane %v826, %v830
          %v833 = vadd.f32 %v823, %v831
          %v834 = vld [vmem:[#allocation15] sm:$0xff]
          %v835 = vld [vmem:[#allocation15 + $0x8] sm:$0xff]
          %v836 = vld [vmem:[#allocation15 + $0x10] sm:$0xff]
          %v837 = vld [vmem:[#allocation15 + $0x18] sm:$0xff]
          %v839 = vsel %vm589, %v671, 0
          %841 = vmatprep.subr.mxu0 0.0
          %842 = vmatpush1.msra.mxu0 %v834
          %843 = vmatprep.subr.mxu0 0.0
          %844 = vmatpush1.msra.mxu0 %v835
          %845 = vmatprep.subr.mxu0 0.0
          %846 = vmatpush1.msra.mxu0 %v836
          %847 = vmatprep.subr.mxu0 0.0
          %848 = vmatpush1.msra.mxu0 %v837
          %849 = vmatprep.subr.mxu0 0.0
          %850 = vmatpush1.msra.mxu0 0.0
          %851 = vmatprep.subr.mxu0 0.0
          %852 = vmatpush1.msra.mxu0 0.0
          %853 = vmatprep.subr.mxu0 0.0
          %854 = vmatpush1.msra.mxu0 0.0
          %855 = vmatprep.subr.mxu0 0.0
          %856 = vmatpush1.msra.mxu0 0.0
          %857 = vmatprep.subr.mxu0 0.0
          %858 = vmatpush1.msra.mxu0 0.0
          %859 = vmatprep.subr.mxu0 0.0
          %860 = vmatpush1.msra.mxu0 0.0
          %861 = vmatprep.subr.mxu0 0.0
          %862 = vmatpush1.msra.mxu0 0.0
          %863 = vmatprep.subr.mxu0 0.0
          %864 = vmatpush1.msra.mxu0 0.0
          %865 = vmatprep.subr.mxu0 0.0
          %866 = vmatpush1.msra.mxu0 0.0
          %867 = vmatprep.subr.mxu0 0.0
          %868 = vmatpush1.msra.mxu0 0.0
          %869 = vmatprep.subr.mxu0 0.0
          %870 = vmatpush1.msra.mxu0 0.0
          %871 = vmatprep.subr.mxu0 0.0
          %872 = vmatpush1.msra.mxu0 0.0
          %873 = vmatprep.subr.mxu0 0.0
          %874 = vmatpush1.msra.mxu0 0.0
          %875 = vmatprep.subr.mxu0 0.0
          %876 = vmatpush1.msra.mxu0 0.0
          %877 = vmatprep.subr.mxu0 0.0
          %878 = vmatpush1.msra.mxu0 0.0
          %879 = vmatprep.subr.mxu0 0.0
          %880 = vmatpush1.msra.mxu0 0.0
          %881 = vmatprep.subr.mxu0 0.0
          %882 = vmatpush1.msra.mxu0 0.0
          %883 = vmatprep.subr.mxu0 0.0
          %884 = vmatpush1.msra.mxu0 0.0
          %885 = vmatprep.subr.mxu0 0.0
          %886 = vmatpush1.msra.mxu0 0.0
          %887 = vmatprep.subr.mxu0 0.0
          %888 = vmatpush1.msra.mxu0 0.0
          %889 = vmatprep.subr.mxu0 0.0
          %890 = vmatpush1.msra.mxu0 0.0
          %891 = vmatprep.subr.mxu0 0.0
          %892 = vmatpush1.msra.mxu0 0.0
          %893 = vmatprep.subr.mxu0 0.0
          %894 = vmatpush1.msra.mxu0 0.0
          %895 = vmatprep.subr.mxu0 0.0
          %896 = vmatpush1.msra.mxu0 0.0
          %897 = vmatprep.subr.mxu0 0.0
          %898 = vmatpush1.msra.mxu0 0.0
          %899 = vmatprep.subr.mxu0 0.0
          %900 = vmatpush1.msra.mxu0 0.0
          %901 = vmatprep.subr.mxu0 0.0
          %902 = vmatpush1.msra.mxu0 0.0
          %903 = vmatprep.subr.mxu0 0.0
          %904 = vmatpush1.msra.mxu0 0.0
          %905 = vmatprep.mubr.f32.mxu0 0.0
          %906 = vmatmul.mubr.f32.gmra.mrb[0].mxu0 %v839
          %v907 = vpop.f32.mrb[0].mxu0
          %v908 = vadd.f32 0.0, %v907
          %v909 = vpop.f32.mrb[0].mxu0
          %910 = vdwg.mxu0
          %v911 = vadd.f32 %v833, %v908
          %v912 = vxor.u32 %v911, 2147483648
          %v913 = vmul.f32 %v912, 1.442695
          %v914 = vpow.pop %v913
          %v915 = vadd.f32 %v914, 1.0
          %v916 = vrcp.pop %v915
          %v917 = vmul.f32 1.0, %v916
          %s918 = scalar_lea.vmem [#allocation12], 32
          %v919 = vld [vmem:[%s918] sm:$0xff]
          %v920 = vld [vmem:[%s918 + $0x8] sm:$0xff]
          %v921 = vld [vmem:[%s918 + $0x10] sm:$0xff]
          %v922 = vld [vmem:[%s918 + $0x18] sm:$0xff]
          %s923 = scalar_lea.vmem [#allocation13], 32
          %v924 = vld [vmem:[%s923] sm:$0xff]
          %v925 = vld [vmem:[%s923 + $0x8] sm:$0xff]
          %v926 = vld [vmem:[%s923 + $0x10] sm:$0xff]
          %v927 = vld [vmem:[%s923 + $0x18] sm:$0xff]
          %928 = vmatprep.subr.mxu0 0.0
          %929 = vmatpush1.msra.mxu0 %v924
          %930 = vmatprep.subr.mxu0 0.0
          %931 = vmatpush1.msra.mxu0 %v925
          %932 = vmatprep.subr.mxu0 0.0
          %933 = vmatpush1.msra.mxu0 %v926
          %934 = vmatprep.subr.mxu0 0.0
          %935 = vmatpush1.msra.mxu0 %v927
          %936 = vmatprep.subr.mxu0 0.0
          %937 = vmatpush1.msra.mxu0 0.0
          %938 = vmatprep.subr.mxu0 0.0
          %939 = vmatpush1.msra.mxu0 0.0
          %940 = vmatprep.subr.mxu0 0.0
          %941 = vmatpush1.msra.mxu0 0.0
          %942 = vmatprep.subr.mxu0 0.0
          %943 = vmatpush1.msra.mxu0 0.0
          %944 = vmatprep.subr.mxu0 0.0
          %945 = vmatpush1.msra.mxu0 0.0
          %946 = vmatprep.subr.mxu0 0.0
          %947 = vmatpush1.msra.mxu0 0.0
          %948 = vmatprep.subr.mxu0 0.0
          %949 = vmatpush1.msra.mxu0 0.0
          %950 = vmatprep.subr.mxu0 0.0
          %951 = vmatpush1.msra.mxu0 0.0
          %952 = vmatprep.subr.mxu0 0.0
          %953 = vmatpush1.msra.mxu0 0.0
          %954 = vmatprep.subr.mxu0 0.0
          %955 = vmatpush1.msra.mxu0 0.0
          %956 = vmatprep.subr.mxu0 0.0
          %957 = vmatpush1.msra.mxu0 0.0
          %958 = vmatprep.subr.mxu0 0.0
          %959 = vmatpush1.msra.mxu0 0.0
          %960 = vmatprep.subr.mxu0 0.0
          %961 = vmatpush1.msra.mxu0 0.0
          %962 = vmatprep.subr.mxu0 0.0
          %963 = vmatpush1.msra.mxu0 0.0
          %964 = vmatprep.subr.mxu0 0.0
          %965 = vmatpush1.msra.mxu0 0.0
          %966 = vmatprep.subr.mxu0 0.0
          %967 = vmatpush1.msra.mxu0 0.0
          %968 = vmatprep.subr.mxu0 0.0
          %969 = vmatpush1.msra.mxu0 0.0
          %970 = vmatprep.subr.mxu0 0.0
          %971 = vmatpush1.msra.mxu0 0.0
          %972 = vmatprep.subr.mxu0 0.0
          %973 = vmatpush1.msra.mxu0 0.0
          %974 = vmatprep.subr.mxu0 0.0
          %975 = vmatpush1.msra.mxu0 0.0
          %976 = vmatprep.subr.mxu0 0.0
          %977 = vmatpush1.msra.mxu0 0.0
          %978 = vmatprep.subr.mxu0 0.0
          %979 = vmatpush1.msra.mxu0 0.0
          %980 = vmatprep.subr.mxu0 0.0
          %981 = vmatpush1.msra.mxu0 0.0
          %982 = vmatprep.subr.mxu0 0.0
          %983 = vmatpush1.msra.mxu0 0.0
          %984 = vmatprep.subr.mxu0 0.0
          %985 = vmatpush1.msra.mxu0 0.0
          %986 = vmatprep.subr.mxu0 0.0
          %987 = vmatpush1.msra.mxu0 0.0
          %988 = vmatprep.subr.mxu0 0.0
          %989 = vmatpush1.msra.mxu0 0.0
          %990 = vmatprep.subr.mxu0 0.0
          %991 = vmatpush1.msra.mxu0 0.0
          %992 = vmatprep.mubr.f32.mxu0 0.0
          %993 = vmatmul.mubr.f32.gmra.mrb[0].mxu0 %v681
          %v994 = vpop.f32.mrb[0].mxu0
          %v995 = vadd.f32 0.0, %v994
          %v996 = vpop.f32.mrb[0].mxu0
          %997 = vdwg.mxu0
          %998 = vmatprep.subr.mxu0 0.0
          %999 = vmatpush1.msra.mxu0 %v919
          %1000 = vmatprep.subr.mxu0 0.0
          %1001 = vmatpush1.msra.mxu0 %v920
          %1002 = vmatprep.subr.mxu0 0.0
          %1003 = vmatpush1.msra.mxu0 %v921
          %1004 = vmatprep.subr.mxu0 0.0
          %1005 = vmatpush1.msra.mxu0 %v922
          %1006 = vmatprep.subr.mxu0 0.0
          %1007 = vmatpush1.msra.mxu0 0.0
          %1008 = vmatprep.subr.mxu0 0.0
          %1009 = vmatpush1.msra.mxu0 0.0
          %1010 = vmatprep.subr.mxu0 0.0
          %1011 = vmatpush1.msra.mxu0 0.0
          %1012 = vmatprep.subr.mxu0 0.0
          %1013 = vmatpush1.msra.mxu0 0.0
          %1014 = vmatprep.subr.mxu0 0.0
          %1015 = vmatpush1.msra.mxu0 0.0
          %1016 = vmatprep.subr.mxu0 0.0
          %1017 = vmatpush1.msra.mxu0 0.0
          %1018 = vmatprep.subr.mxu0 0.0
          %1019 = vmatpush1.msra.mxu0 0.0
          %1020 = vmatprep.subr.mxu0 0.0
          %1021 = vmatpush1.msra.mxu0 0.0
          %1022 = vmatprep.subr.mxu0 0.0
          %1023 = vmatpush1.msra.mxu0 0.0
          %1024 = vmatprep.subr.mxu0 0.0
          %1025 = vmatpush1.msra.mxu0 0.0
          %1026 = vmatprep.subr.mxu0 0.0
          %1027 = vmatpush1.msra.mxu0 0.0
          %1028 = vmatprep.subr.mxu0 0.0
          %1029 = vmatpush1.msra.mxu0 0.0
          %1030 = vmatprep.subr.mxu0 0.0
          %1031 = vmatpush1.msra.mxu0 0.0
          %1032 = vmatprep.subr.mxu0 0.0
          %1033 = vmatpush1.msra.mxu0 0.0
          %1034 = vmatprep.subr.mxu0 0.0
          %1035 = vmatpush1.msra.mxu0 0.0
          %1036 = vmatprep.subr.mxu0 0.0
          %1037 = vmatpush1.msra.mxu0 0.0
          %1038 = vmatprep.subr.mxu0 0.0
          %1039 = vmatpush1.msra.mxu0 0.0
          %1040 = vmatprep.subr.mxu0 0.0
          %1041 = vmatpush1.msra.mxu0 0.0
          %1042 = vmatprep.subr.mxu0 0.0
          %1043 = vmatpush1.msra.mxu0 0.0
          %1044 = vmatprep.subr.mxu0 0.0
          %1045 = vmatpush1.msra.mxu0 0.0
          %1046 = vmatprep.subr.mxu0 0.0
          %1047 = vmatpush1.msra.mxu0 0.0
          %1048 = vmatprep.subr.mxu0 0.0
          %1049 = vmatpush1.msra.mxu0 0.0
          %1050 = vmatprep.subr.mxu0 0.0
          %1051 = vmatpush1.msra.mxu0 0.0
          %1052 = vmatprep.subr.mxu0 0.0
          %1053 = vmatpush1.msra.mxu0 0.0
          %1054 = vmatprep.subr.mxu0 0.0
          %1055 = vmatpush1.msra.mxu0 0.0
          %1056 = vmatprep.subr.mxu0 0.0
          %1057 = vmatpush1.msra.mxu0 0.0
          %1058 = vmatprep.subr.mxu0 0.0
          %1059 = vmatpush1.msra.mxu0 0.0
          %1060 = vmatprep.subr.mxu0 0.0
          %1061 = vmatpush1.msra.mxu0 0.0
          %1062 = vmatprep.mubr.f32.mxu0 0.0
          %1063 = vmatmul.mubr.f32.gmra.mrb[0].mxu0 %v754
          %v1064 = vpop.f32.mrb[0].mxu0
          %v1065 = vadd.f32 %v995, %v1064
          %v1066 = vpop.f32.mrb[0].mxu0
          %1067 = vdwg.mxu0
          %s1068 = scalar_lea.vmem %s7, 1
          %v1069 = vld [vmem:[%s1068] sm:$0x1]
          %v1071 = vlaneseq
          %v1072 = vshrl.u32 %v1071, 7
          %v1073 = vsub.s32 0, %v1072
          %v1074 = vrot.slane %v1069, %v1073
          %v1076 = vadd.f32 %v1065, %v1074
          %s1077 = scalar_lea.vmem [#allocation15], 32
          %v1078 = vld [vmem:[%s1077] sm:$0xff]
          %v1079 = vld [vmem:[%s1077 + $0x8] sm:$0xff]
          %v1080 = vld [vmem:[%s1077 + $0x10] sm:$0xff]
          %v1081 = vld [vmem:[%s1077 + $0x18] sm:$0xff]
          %1082 = vmatprep.subr.mxu0 0.0
          %1083 = vmatpush1.msra.mxu0 %v1078
          %1084 = vmatprep.subr.mxu0 0.0
          %1085 = vmatpush1.msra.mxu0 %v1079
          %1086 = vmatprep.subr.mxu0 0.0
          %1087 = vmatpush1.msra.mxu0 %v1080
          %1088 = vmatprep.subr.mxu0 0.0
          %1089 = vmatpush1.msra.mxu0 %v1081
          %1090 = vmatprep.subr.mxu0 0.0
          %1091 = vmatpush1.msra.mxu0 0.0
          %1092 = vmatprep.subr.mxu0 0.0
          %1093 = vmatpush1.msra.mxu0 0.0
          %1094 = vmatprep.subr.mxu0 0.0
          %1095 = vmatpush1.msra.mxu0 0.0
          %1096 = vmatprep.subr.mxu0 0.0
          %1097 = vmatpush1.msra.mxu0 0.0
          %1098 = vmatprep.subr.mxu0 0.0
          %1099 = vmatpush1.msra.mxu0 0.0
          %1100 = vmatprep.subr.mxu0 0.0
          %1101 = vmatpush1.msra.mxu0 0.0
          %1102 = vmatprep.subr.mxu0 0.0
          %1103 = vmatpush1.msra.mxu0 0.0
          %1104 = vmatprep.subr.mxu0 0.0
          %1105 = vmatpush1.msra.mxu0 0.0
          %1106 = vmatprep.subr.mxu0 0.0
          %1107 = vmatpush1.msra.mxu0 0.0
          %1108 = vmatprep.subr.mxu0 0.0
          %1109 = vmatpush1.msra.mxu0 0.0
          %1110 = vmatprep.subr.mxu0 0.0
          %1111 = vmatpush1.msra.mxu0 0.0
          %1112 = vmatprep.subr.mxu0 0.0
          %1113 = vmatpush1.msra.mxu0 0.0
          %1114 = vmatprep.subr.mxu0 0.0
          %1115 = vmatpush1.msra.mxu0 0.0
          %1116 = vmatprep.subr.mxu0 0.0
          %1117 = vmatpush1.msra.mxu0 0.0
          %1118 = vmatprep.subr.mxu0 0.0
          %1119 = vmatpush1.msra.mxu0 0.0
          %1120 = vmatprep.subr.mxu0 0.0
          %1121 = vmatpush1.msra.mxu0 0.0
          %1122 = vmatprep.subr.mxu0 0.0
          %1123 = vmatpush1.msra.mxu0 0.0
          %1124 = vmatprep.subr.mxu0 0.0
          %1125 = vmatpush1.msra.mxu0 0.0
          %1126 = vmatprep.subr.mxu0 0.0
          %1127 = vmatpush1.msra.mxu0 0.0
          %1128 = vmatprep.subr.mxu0 0.0
          %1129 = vmatpush1.msra.mxu0 0.0
          %1130 = vmatprep.subr.mxu0 0.0
          %1131 = vmatpush1.msra.mxu0 0.0
          %1132 = vmatprep.subr.mxu0 0.0
          %1133 = vmatpush1.msra.mxu0 0.0
          %1134 = vmatprep.subr.mxu0 0.0
          %1135 = vmatpush1.msra.mxu0 0.0
          %1136 = vmatprep.subr.mxu0 0.0
          %1137 = vmatpush1.msra.mxu0 0.0
          %1138 = vmatprep.subr.mxu0 0.0
          %1139 = vmatpush1.msra.mxu0 0.0
          %1140 = vmatprep.subr.mxu0 0.0
          %1141 = vmatpush1.msra.mxu0 0.0
          %1142 = vmatprep.subr.mxu0 0.0
          %1143 = vmatpush1.msra.mxu0 0.0
          %1144 = vmatprep.subr.mxu0 0.0
          %1145 = vmatpush1.msra.mxu0 0.0
          %1146 = vmatprep.mubr.f32.mxu0 0.0
          %1147 = vmatmul.mubr.f32.gmra.mrb[0].mxu0 %v839
          %v1148 = vpop.f32.mrb[0].mxu0
          %v1149 = vadd.f32 0.0, %v1148
          %v1150 = vpop.f32.mrb[0].mxu0
          %1151 = vdwg.mxu0
          %v1152 = vadd.f32 %v1076, %v1149
          %v1153 = vxor.u32 %v1152, 2147483648
          %v1154 = vmul.f32 %v1153, 1.442695
          %v1155 = vpow.pop %v1154
          %v1156 = vadd.f32 %v1155, 1.0
          %v1157 = vrcp.pop %v1156
          %v1158 = vmul.f32 1.0, %v1157
          %s1159 = scalar_lea.vmem [#allocation12], 64
          %v1160 = vld [vmem:[%s1159] sm:$0xff]
          %v1161 = vld [vmem:[%s1159 + $0x8] sm:$0xff]
          %v1162 = vld [vmem:[%s1159 + $0x10] sm:$0xff]
          %v1163 = vld [vmem:[%s1159 + $0x18] sm:$0xff]
          %s1164 = scalar_lea.vmem [#allocation13], 64
          %v1165 = vld [vmem:[%s1164] sm:$0xff]
          %v1166 = vld [vmem:[%s1164 + $0x8] sm:$0xff]
          %v1167 = vld [vmem:[%s1164 + $0x10] sm:$0xff]
          %v1168 = vld [vmem:[%s1164 + $0x18] sm:$0xff]
          %1169 = vmatprep.subr.mxu0 0.0
          %1170 = vmatpush1.msra.mxu0 %v1165
          %1171 = vmatprep.subr.mxu0 0.0
          %1172 = vmatpush1.msra.mxu0 %v1166
          %1173 = vmatprep.subr.mxu0 0.0
          %1174 = vmatpush1.msra.mxu0 %v1167
          %1175 = vmatprep.subr.mxu0 0.0
          %1176 = vmatpush1.msra.mxu0 %v1168
          %1177 = vmatprep.subr.mxu0 0.0
          %1178 = vmatpush1.msra.mxu0 0.0
          %1179 = vmatprep.subr.mxu0 0.0
          %1180 = vmatpush1.msra.mxu0 0.0
          %1181 = vmatprep.subr.mxu0 0.0
          %1182 = vmatpush1.msra.mxu0 0.0
          %1183 = vmatprep.subr.mxu0 0.0
          %1184 = vmatpush1.msra.mxu0 0.0
          %1185 = vmatprep.subr.mxu0 0.0
          %1186 = vmatpush1.msra.mxu0 0.0
          %1187 = vmatprep.subr.mxu0 0.0
          %1188 = vmatpush1.msra.mxu0 0.0
          %1189 = vmatprep.subr.mxu0 0.0
          %1190 = vmatpush1.msra.mxu0 0.0
          %1191 = vmatprep.subr.mxu0 0.0
          %1192 = vmatpush1.msra.mxu0 0.0
          %1193 = vmatprep.subr.mxu0 0.0
          %1194 = vmatpush1.msra.mxu0 0.0
          %1195 = vmatprep.subr.mxu0 0.0
          %1196 = vmatpush1.msra.mxu0 0.0
          %1197 = vmatprep.subr.mxu0 0.0
          %1198 = vmatpush1.msra.mxu0 0.0
          %1199 = vmatprep.subr.mxu0 0.0
          %1200 = vmatpush1.msra.mxu0 0.0
          %1201 = vmatprep.subr.mxu0 0.0
          %1202 = vmatpush1.msra.mxu0 0.0
          %1203 = vmatprep.subr.mxu0 0.0
          %1204 = vmatpush1.msra.mxu0 0.0
          %1205 = vmatprep.subr.mxu0 0.0
          %1206 = vmatpush1.msra.mxu0 0.0
          %1207 = vmatprep.subr.mxu0 0.0
          %1208 = vmatpush1.msra.mxu0 0.0
          %1209 = vmatprep.subr.mxu0 0.0
          %1210 = vmatpush1.msra.mxu0 0.0
          %1211 = vmatprep.subr.mxu0 0.0
          %1212 = vmatpush1.msra.mxu0 0.0
          %1213 = vmatprep.subr.mxu0 0.0
          %1214 = vmatpush1.msra.mxu0 0.0
          %1215 = vmatprep.subr.mxu0 0.0
          %1216 = vmatpush1.msra.mxu0 0.0
          %1217 = vmatprep.subr.mxu0 0.0
          %1218 = vmatpush1.msra.mxu0 0.0
          %1219 = vmatprep.subr.mxu0 0.0
          %1220 = vmatpush1.msra.mxu0 0.0
          %1221 = vmatprep.subr.mxu0 0.0
          %1222 = vmatpush1.msra.mxu0 0.0
          %1223 = vmatprep.subr.mxu0 0.0
          %1224 = vmatpush1.msra.mxu0 0.0
          %1225 = vmatprep.subr.mxu0 0.0
          %1226 = vmatpush1.msra.mxu0 0.0
          %1227 = vmatprep.subr.mxu0 0.0
          %1228 = vmatpush1.msra.mxu0 0.0
          %1229 = vmatprep.subr.mxu0 0.0
          %1230 = vmatpush1.msra.mxu0 0.0
          %1231 = vmatprep.subr.mxu0 0.0
          %1232 = vmatpush1.msra.mxu0 0.0
          %1233 = vmatprep.mubr.f32.mxu0 0.0
          %1234 = vmatmul.mubr.f32.gmra.mrb[0].mxu0 %v681
          %v1235 = vpop.f32.mrb[0].mxu0
          %v1236 = vadd.f32 0.0, %v1235
          %v1237 = vpop.f32.mrb[0].mxu0
          %1238 = vdwg.mxu0
          %1239 = vmatprep.subr.mxu0 0.0
          %1240 = vmatpush1.msra.mxu0 %v1160
          %1241 = vmatprep.subr.mxu0 0.0
          %1242 = vmatpush1.msra.mxu0 %v1161
          %1243 = vmatprep.subr.mxu0 0.0
          %1244 = vmatpush1.msra.mxu0 %v1162
          %1245 = vmatprep.subr.mxu0 0.0
          %1246 = vmatpush1.msra.mxu0 %v1163
          %1247 = vmatprep.subr.mxu0 0.0
          %1248 = vmatpush1.msra.mxu0 0.0
          %1249 = vmatprep.subr.mxu0 0.0
          %1250 = vmatpush1.msra.mxu0 0.0
          %1251 = vmatprep.subr.mxu0 0.0
          %1252 = vmatpush1.msra.mxu0 0.0
          %1253 = vmatprep.subr.mxu0 0.0
          %1254 = vmatpush1.msra.mxu0 0.0
          %1255 = vmatprep.subr.mxu0 0.0
          %1256 = vmatpush1.msra.mxu0 0.0
          %1257 = vmatprep.subr.mxu0 0.0
          %1258 = vmatpush1.msra.mxu0 0.0
          %1259 = vmatprep.subr.mxu0 0.0
          %1260 = vmatpush1.msra.mxu0 0.0
          %1261 = vmatprep.subr.mxu0 0.0
          %1262 = vmatpush1.msra.mxu0 0.0
          %1263 = vmatprep.subr.mxu0 0.0
          %1264 = vmatpush1.msra.mxu0 0.0
          %1265 = vmatprep.subr.mxu0 0.0
          %1266 = vmatpush1.msra.mxu0 0.0
          %1267 = vmatprep.subr.mxu0 0.0
          %1268 = vmatpush1.msra.mxu0 0.0
          %1269 = vmatprep.subr.mxu0 0.0
          %1270 = vmatpush1.msra.mxu0 0.0
          %1271 = vmatprep.subr.mxu0 0.0
          %1272 = vmatpush1.msra.mxu0 0.0
          %1273 = vmatprep.subr.mxu0 0.0
          %1274 = vmatpush1.msra.mxu0 0.0
          %1275 = vmatprep.subr.mxu0 0.0
          %1276 = vmatpush1.msra.mxu0 0.0
          %1277 = vmatprep.subr.mxu0 0.0
          %1278 = vmatpush1.msra.mxu0 0.0
          %1279 = vmatprep.subr.mxu0 0.0
          %1280 = vmatpush1.msra.mxu0 0.0
          %1281 = vmatprep.subr.mxu0 0.0
          %1282 = vmatpush1.msra.mxu0 0.0
          %1283 = vmatprep.subr.mxu0 0.0
          %1284 = vmatpush1.msra.mxu0 0.0
          %1285 = vmatprep.subr.mxu0 0.0
          %1286 = vmatpush1.msra.mxu0 0.0
          %1287 = vmatprep.subr.mxu0 0.0
          %1288 = vmatpush1.msra.mxu0 0.0
          %1289 = vmatprep.subr.mxu0 0.0
          %1290 = vmatpush1.msra.mxu0 0.0
          %1291 = vmatprep.subr.mxu0 0.0
          %1292 = vmatpush1.msra.mxu0 0.0
          %1293 = vmatprep.subr.mxu0 0.0
          %1294 = vmatpush1.msra.mxu0 0.0
          %1295 = vmatprep.subr.mxu0 0.0
          %1296 = vmatpush1.msra.mxu0 0.0
          %1297 = vmatprep.subr.mxu0 0.0
          %1298 = vmatpush1.msra.mxu0 0.0
          %1299 = vmatprep.subr.mxu0 0.0
          %1300 = vmatpush1.msra.mxu0 0.0
          %1301 = vmatprep.subr.mxu0 0.0
          %1302 = vmatpush1.msra.mxu0 0.0
          %1303 = vmatprep.mubr.f32.mxu0 0.0
          %1304 = vmatmul.mubr.f32.gmra.mrb[0].mxu0 %v754
          %v1305 = vpop.f32.mrb[0].mxu0
          %v1306 = vadd.f32 %v1236, %v1305
          %v1307 = vpop.f32.mrb[0].mxu0
          %1308 = vdwg.mxu0
          %s1309 = scalar_lea.vmem %s7, 2
          %v1310 = vld [vmem:[%s1309] sm:$0x1]
          %v1312 = vlaneseq
          %v1313 = vshrl.u32 %v1312, 7
          %v1314 = vsub.s32 0, %v1313
          %v1315 = vrot.slane %v1310, %v1314
          %v1317 = vadd.f32 %v1306, %v1315
          %v1318 = vmul.f32 %v917, %v671
          %s1319 = scalar_lea.vmem [#allocation15], 64
          %v1320 = vld [vmem:[%s1319] sm:$0xff]
          %v1321 = vld [vmem:[%s1319 + $0x8] sm:$0xff]
          %v1322 = vld [vmem:[%s1319 + $0x10] sm:$0xff]
          %v1323 = vld [vmem:[%s1319 + $0x18] sm:$0xff]
          %v1325 = vsel %vm589, %v1318, 0
          %1327 = vmatprep.subr.mxu0 0.0
          %1328 = vmatpush1.msra.mxu0 %v1320
          %1329 = vmatprep.subr.mxu0 0.0
          %1330 = vmatpush1.msra.mxu0 %v1321
          %1331 = vmatprep.subr.mxu0 0.0
          %1332 = vmatpush1.msra.mxu0 %v1322
          %1333 = vmatprep.subr.mxu0 0.0
          %1334 = vmatpush1.msra.mxu0 %v1323
          %1335 = vmatprep.subr.mxu0 0.0
          %1336 = vmatpush1.msra.mxu0 0.0
          %1337 = vmatprep.subr.mxu0 0.0
          %1338 = vmatpush1.msra.mxu0 0.0
          %1339 = vmatprep.subr.mxu0 0.0
          %1340 = vmatpush1.msra.mxu0 0.0
          %1341 = vmatprep.subr.mxu0 0.0
          %1342 = vmatpush1.msra.mxu0 0.0
          %1343 = vmatprep.subr.mxu0 0.0
          %1344 = vmatpush1.msra.mxu0 0.0
          %1345 = vmatprep.subr.mxu0 0.0
          %1346 = vmatpush1.msra.mxu0 0.0
          %1347 = vmatprep.subr.mxu0 0.0
          %1348 = vmatpush1.msra.mxu0 0.0
          %1349 = vmatprep.subr.mxu0 0.0
          %1350 = vmatpush1.msra.mxu0 0.0
          %1351 = vmatprep.subr.mxu0 0.0
          %1352 = vmatpush1.msra.mxu0 0.0
          %1353 = vmatprep.subr.mxu0 0.0
          %1354 = vmatpush1.msra.mxu0 0.0
          %1355 = vmatprep.subr.mxu0 0.0
          %1356 = vmatpush1.msra.mxu0 0.0
          %1357 = vmatprep.subr.mxu0 0.0
          %1358 = vmatpush1.msra.mxu0 0.0
          %1359 = vmatprep.subr.mxu0 0.0
          %1360 = vmatpush1.msra.mxu0 0.0
          %1361 = vmatprep.subr.mxu0 0.0
          %1362 = vmatpush1.msra.mxu0 0.0
          %1363 = vmatprep.subr.mxu0 0.0
          %1364 = vmatpush1.msra.mxu0 0.0
          %1365 = vmatprep.subr.mxu0 0.0
          %1366 = vmatpush1.msra.mxu0 0.0
          %1367 = vmatprep.subr.mxu0 0.0
          %1368 = vmatpush1.msra.mxu0 0.0
          %1369 = vmatprep.subr.mxu0 0.0
          %1370 = vmatpush1.msra.mxu0 0.0
          %1371 = vmatprep.subr.mxu0 0.0
          %1372 = vmatpush1.msra.mxu0 0.0
          %1373 = vmatprep.subr.mxu0 0.0
          %1374 = vmatpush1.msra.mxu0 0.0
          %1375 = vmatprep.subr.mxu0 0.0
          %1376 = vmatpush1.msra.mxu0 0.0
          %1377 = vmatprep.subr.mxu0 0.0
          %1378 = vmatpush1.msra.mxu0 0.0
          %1379 = vmatprep.subr.mxu0 0.0
          %1380 = vmatpush1.msra.mxu0 0.0
          %1381 = vmatprep.subr.mxu0 0.0
          %1382 = vmatpush1.msra.mxu0 0.0
          %1383 = vmatprep.subr.mxu0 0.0
          %1384 = vmatpush1.msra.mxu0 0.0
          %1385 = vmatprep.subr.mxu0 0.0
          %1386 = vmatpush1.msra.mxu0 0.0
          %1387 = vmatprep.subr.mxu0 0.0
          %1388 = vmatpush1.msra.mxu0 0.0
          %1389 = vmatprep.subr.mxu0 0.0
          %1390 = vmatpush1.msra.mxu0 0.0
          %1391 = vmatprep.mubr.f32.mxu0 0.0
          %1392 = vmatmul.mubr.f32.gmra.mrb[0].mxu0 %v1325
          %v1393 = vpop.f32.mrb[0].mxu0
          %v1394 = vadd.f32 0.0, %v1393
          %v1395 = vpop.f32.mrb[0].mxu0
          %1396 = vdwg.mxu0
          %v1397 = vadd.f32 %v1317, %v1394
          %v1398 = vtanh.pop %v1397
          %v1399 = vsub.f32 1.0, %v1158
          %v1400 = vmul.f32 %v1399, %v671
          %v1401 = vmul.f32 %v1158, %v1398
          %v1402 = vadd.f32 %v1400, %v1401
          %1403 = vst.msk [vmem:[%s500] sm:$0xff] %vm589, %v1402
        $region88: #{tpu_custom_call.1} parent=51 // pred_fallthru
          _
        %s1404 = sand.u32 %s246, 1
        %s1405 = scalar_lea.sflag [#allocation6], %s1404
        %s1406 = sand.u32 %s246, 1
        %s1407 = smul.addr %s1406, 8
        %s1408 = scalar_lea.vmem [#allocation16], %s1407
        // Predicated region
        $region89: #{tpu_custom_call.1} parent=51 // pred_check
          %p1409 = pneg %p256
        $region90: #{tpu_custom_call.1} parent=51 // pred_check_branch
          %1411 = sbr.rel (%p1409) target = $region92
        $region91: #{tpu_custom_call.1} parent=51 // pred_region
          %s1413 = ssub.s32 128, 128
          %1414 = vsyncadd %s1405, %s1413
          %s1415 = smul.addr %s36, 128
          %s1416 = scalar_lea.hbm %s8, %s1415
          %s1418 = sshll.u32 %s1408, 4
          %s1419 = int_to_ptr.vmem [resolvable:$true] %s1418
          %1421 = dma.vmem_to_hbm [thread:$0]  %s1419, 128, %s1416, %s1405
        $region92: #{tpu_custom_call.1} parent=51 // pred_fallthru
          _
      $region52: #{tpu_custom_call.1} parent=5 // pred_fallthru
        _
      %p1422 = scmp.le.s32.totalorder 2, %s27
      // Predicated region
      $region93: #{tpu_custom_call.1} parent=5 // pred_check
        %p1423 = pneg %p1422
      $region94: #{tpu_custom_call.1} parent=5 // pred_check_branch
        %1425 = sbr.rel (%p1423) target = $region96
      $region95: #{tpu_custom_call.1} parent=5 // pred_region
        %s1426 = ssub.s32 %s27, 2
        // Predicated region
        $region97: #{tpu_custom_call.1} parent=95 // pred_check
          %p1427 = pneg %p262
        $region98: #{tpu_custom_call.1} parent=95 // pred_check_branch
          %1429 = sbr.rel (%p1427) target = $region100
        $region99: #{tpu_custom_call.1} parent=95 // pred_region
          %s1430 = sand.u32 %s247, 1
          %s1431 = scalar_lea.sflag [#allocation6], %s1430
          %s1432 = sand.u32 %s247, 1
          %s1433 = smul.addr %s1432, 8
          %s1434 = scalar_lea.vmem [#allocation16], %s1433
          %1435 = dma.done %s1431, 128
        $region100: #{tpu_custom_call.1} parent=95 // pred_fallthru
          _
      $region96: #{tpu_custom_call.1} parent=5 // pred_fallthru
        _
    $region6: #{tpu_custom_call.1} parent=1 // loop_footer
      %s31 = sadd.s32 1, %s27
    $region7: #{tpu_custom_call.1} parent=1 // loop_footer_branch
      %26 = sbr.rel target = $region3
    $region8: #{tpu_custom_call.1} parent=1 // loop_exit
      _
    %1436 = vsyncpa [#allocation5], 1
    %s1437 = scalar_lea.sflag [#allocation5], 1
    %1438 = vsyncpa %s1437, 1
    %1439 = vsyncpa [#allocation8], 1
    %s1440 = scalar_lea.sflag [#allocation8], 1
    %1441 = vsyncpa %s1440, 1
    %1442 = vsyncpa [#allocation11], 1
    %s1443 = scalar_lea.sflag [#allocation11], 1
    %1444 = vsyncpa %s1443, 1
    %1445 = vsyncpa [#allocation14], 1
    %1446 = vsyncpa [#allocation6], 1
    %s1447 = scalar_lea.sflag [#allocation6], 1
    %1448 = vsyncpa %s1447, 1

</llo_original>
